<compile_context>
chip_gen: v5e
topology: v5e:2x2
jax: 0.10.0
libtpu: 0.0.40
codegen_flags: <defaults>
</compile_context>

<pallas_src>
import functools

import jax
import jax.numpy as jnp
from jax.experimental import pallas as pl
from jax.experimental.pallas import tpu as pltpu

EPS = 1e-5
NEG_SLOPE = 0.01


# -----------------------------------------------------------------------------
# Fused kernel: edge update + softmax-attention reduce + node update.
# Grid: (dst_tiles, src_tiles); src is the reduction axis (online softmax).
# -----------------------------------------------------------------------------
def _fused_mpl_kernel(
    nfeat_s_ref, nfeat_d_ref, efeat_ref,
    we_s_ref, we_e_ref, we_d_ref, cs_we_ref, be_ref, wa_ref,
    wn_n_ref, wn_a_ref, cs_wn_ref, bn_ref,
    nfeat_out_ref, ef_out_ref, attn_out_ref,
    m_sc, l_sc, acc_sc, dsum_sc, dsq_sc, pdst_sc,
):
    s_idx = pl.program_id(1)
    n_src_steps = pl.num_programs(1)

    src = nfeat_s_ref[...].astype(jnp.float32)      # [ts, n_in]
    ef = efeat_ref[...].astype(jnp.float32)         # [td, ts, e_in]  (bf16 in HBM)

    td, ts, e_in = ef.shape
    n_in = src.shape[1]
    eo = we_s_ref.shape[1]
    fe = float(2 * n_in + e_in)

    # --- dst-invariant work: once per dst tile (src step 0), cached in scratch
    @pl.when(s_idx == 0)
    def _init():
        dst0 = nfeat_d_ref[...].astype(jnp.float32)                    # [td, n_in]
        dsum_sc[...] = jnp.sum(dst0, axis=-1, keepdims=True)           # [td, 1]
        dsq_sc[...] = jnp.sum(dst0 * dst0, axis=-1, keepdims=True)
        pdst_sc[...] = jnp.dot(dst0, we_d_ref[...],
                               preferred_element_type=jnp.float32)      # [td, eo]
        m_sc[...] = jnp.full(m_sc.shape, -jnp.inf, m_sc.dtype)
        l_sc[...] = jnp.zeros(l_sc.shape, l_sc.dtype)
        acc_sc[...] = jnp.zeros(acc_sc.shape, acc_sc.dtype)

    # --- per-row instance-norm stats of concat([src, efeat, dst]) from segment sums
    sum_src = jnp.sum(src, axis=-1, keepdims=True)          # [ts, 1]
    sq_src = jnp.sum(src * src, axis=-1, keepdims=True)
    sum_ef = jnp.sum(ef, axis=-1, keepdims=True)            # [td, ts, 1]
    sq_ef = jnp.sum(ef * ef, axis=-1, keepdims=True)
    sum_dst = dsum_sc[...]                                   # [td, 1]   (cached)
    sq_dst = dsq_sc[...]

    mean3 = (sum_src[None, :, :] + sum_ef + sum_dst[:, None, :]) / fe   # [td, ts, 1]
    msq3 = (sq_src[None, :, :] + sq_ef + sq_dst[:, None, :]) / fe
    rstd3 = jax.lax.rsqrt(jnp.maximum(msq3 - mean3 * mean3, 0.0) + EPS)

    # --- split matmul: x @ W_e (per-node partials computed once, not per-edge)
    p_src = jnp.dot(src, we_s_ref[...], preferred_element_type=jnp.float32)   # [ts, eo]
    # leading-dim merge/split only -> no relayout copy
    p_ef = jnp.dot(ef.reshape(td * ts, e_in), we_e_ref[...],
                   preferred_element_type=jnp.float32).reshape(td, ts, eo)
    xw = p_ef + p_src[None, :, :] + pdst_sc[...][:, None, :]                  # [td, ts, eo]

    # instance-norm folded into the matmul: ((x-mean)*rstd)@W = rstd*(x@W - mean*colsum(W))
    y = rstd3 * (xw - mean3 * cs_we_ref[...]) + be_ref[...]
    y = jnp.maximum(y, NEG_SLOPE * y)               # leaky_relu, 2 VALU ops

    # attention logit as a lane-dense VPU/XLU reduction (no width-1 MXU pass)
    attn = jnp.sum(y * wa_ref[...], axis=-1)        # [td, ts]

    ef_out_ref[...] = y.astype(ef_out_ref.dtype)          # bf16 writeback
    attn_out_ref[...] = attn.astype(attn_out_ref.dtype)   # bf16 writeback

    # --- online softmax over the source axis + weighted edge-feature accumulation
    m_prev = m_sc[...]                                                   # [td, 1]
    m_new = jnp.maximum(m_prev, jnp.max(attn, axis=-1, keepdims=True))
    corr = jnp.exp(m_prev - m_new)
    p = jnp.exp(attn - m_new)                                            # [td, ts]
    l_sc[...] = corr * l_sc[...] + jnp.sum(p, axis=-1, keepdims=True)
    acc_sc[...] = corr * acc_sc[...] + jnp.sum(p[:, :, None] * y, axis=1)
    m_sc[...] = m_new

    # --- node update on the final source step
    @pl.when(s_idx == n_src_steps - 1)
    def _finalize():
        dst = nfeat_d_ref[...].astype(jnp.float32)
        attn_feat = acc_sc[...] * pl.reciprocal(l_sc[...], approx=False)  # [td, eo]
        fn = float(n_in + eo)
        mean2 = (dsum_sc[...] + jnp.sum(attn_feat, axis=-1, keepdims=True)) / fn
        msq2 = (dsq_sc[...] + jnp.sum(attn_feat * attn_feat, axis=-1, keepdims=True)) / fn
        rstd2 = jax.lax.rsqrt(jnp.maximum(msq2 - mean2 * mean2, 0.0) + EPS)
        xw2 = (jnp.dot(dst, wn_n_ref[...], preferred_element_type=jnp.float32)
               + jnp.dot(attn_feat, wn_a_ref[...], preferred_element_type=jnp.float32))
        y2 = rstd2 * (xw2 - mean2 * cs_wn_ref[...]) + bn_ref[...]
        nfeat_out_ref[...] = jnp.maximum(y2, NEG_SLOPE * y2).astype(nfeat_out_ref.dtype)


def _vmem_capacity_bytes():
    """Physical per-core VMEM; conservative 64 MiB (v7x) fallback."""
    try:
        return int(pltpu.get_tpu_info().vmem_capacity_bytes)
    except Exception:
        return 64 * 1024 * 1024


# -----------------------------------------------------------------------------
# MessagePassingLayer forward (complete graph).
# -----------------------------------------------------------------------------
def message_passing_layer(nfeat, efeat, params, *, tile_d=None, tile_s=None):
    """nfeat: [N, node_n_in]; efeat: [N_dst, N_src, edge_n_in] (edge e = dst*N+src).

    efeat is consumed in bf16; ef_new / attn are returned in bf16 (chain layers
    without any f32<->bf16 conversion passes). nfeat stays f32.
    """
    N, n_in = nfeat.shape
    e_in = efeat.shape[-1]
    w_e = params["w_e"]            # [2*n_in + e_in, Eo], rows ordered [src, efeat, dst]
    eo = w_e.shape[1]
    w_n = params["w_n"]            # [n_in + Eo, No]
    no = w_n.shape[1]

    nfeat = nfeat.astype(jnp.float32)
    efeat = efeat.astype(jnp.bfloat16)      # halve HBM read of the N^2 tensor

    vmem_cap = _vmem_capacity_bytes()
    vmem_limit = int(0.75 * vmem_cap)       # 96 MiB on v5e/v6e, 48 MiB on v7x

    # --- tile defaults --------------------------------------------------------
    # dst: keep >= 2 dst tiles when possible so megacore / 2-TC sharding is useful.
    if tile_d is None:
        if N % 128 == 0 and N >= 512:
            tile_d = 128
        elif N % 64 == 0 and N >= 128:
            tile_d = 64
        else:
            tile_d = N
    # src: biggest multiple of 128 whose per-step footprint (double-buffered bf16
    # efeat/ef_out blocks + f32 in-body temporaries) fits comfortably in VMEM.
    if tile_s is None:
        if N <= 256:
            tile_s = N
        else:
            # rough bytes per (dst, src) pair inside one grid step
            bytes_per_pair = (2 * 2 * e_in      # efeat bf16, double-buffered
                              + 8 * e_in        # f32 upcast + ef*ef temp
                              + 2 * 2 * eo      # ef_out bf16, double-buffered
                              + 16 * eo)        # f32 temporaries (p_ef, xw, y, p*y)
            budget = int(0.6 * vmem_limit)
            tile_s = 512
            while tile_s > 128 and (N % tile_s != 0
                                    or tile_d * tile_s * bytes_per_pair > budget):
                tile_s //= 2

    assert N % tile_d == 0 and N % tile_s == 0
    assert tile_d == N or tile_d % 8 == 0
    assert tile_s == N or tile_s % 128 == 0     # lane-dense attn / efeat tiles

    # split / preprocess weights once (outside the grid; tiny)
    w_e_src = w_e[:n_in]
    w_e_ef = w_e[n_in:n_in + e_in]
    w_e_dst = w_e[n_in + e_in:]
    cs_we = jnp.sum(w_e, axis=0, keepdims=True)           # [1, eo]
    w_n_node = w_n[:n_in]
    w_n_attn = w_n[n_in:]
    cs_wn = jnp.sum(w_n, axis=0, keepdims=True)           # [1, no]
    wa_t = params["w_attn"].reshape(1, eo)
    b_e = params["b_e"].reshape(1, eo)
    b_n = params["b_n"].reshape(1, no)

    const = lambda d, s: (0, 0)
    grid = (N // tile_d, N // tile_s)

    nfeat_new, ef_new, attn = pl.pallas_call(
        _fused_mpl_kernel,
        out_shape=(
            jax.ShapeDtypeStruct((N, no), jnp.float32),
            jax.ShapeDtypeStruct((N, N, eo), jnp.bfloat16),
            jax.ShapeDtypeStruct((N, N), jnp.bfloat16),
        ),
        grid_spec=pltpu.PrefetchScalarGridSpec(
            num_scalar_prefetch=0,
            grid=grid,
            in_specs=[
                pl.BlockSpec((tile_s, n_in), lambda d, s: (s, 0)),         # nfeat as src
                pl.BlockSpec((tile_d, n_in), lambda d, s: (d, 0)),         # nfeat as dst
                pl.BlockSpec((tile_d, tile_s, e_in), lambda d, s: (d, s, 0)),
                pl.BlockSpec((n_in, eo), const),                           # We[src rows]
                pl.BlockSpec((e_in, eo), const),                           # We[efeat rows]
                pl.BlockSpec((n_in, eo), const),                           # We[dst rows]
                pl.BlockSpec((1, eo), const),                              # colsum(We)
                pl.BlockSpec((1, eo), const),                              # b_e
                pl.BlockSpec((1, eo), const),                              # w_attn^T
                pl.BlockSpec((n_in, no), const),                           # Wn[node rows]
                pl.BlockSpec((eo, no), const),                             # Wn[attn rows]
                pl.BlockSpec((1, no), const),                              # colsum(Wn)
                pl.BlockSpec((1, no), const),                              # b_n
            ],
            out_specs=[
                pl.BlockSpec((tile_d, no), lambda d, s: (d, 0)),           # nfeat out
                pl.BlockSpec((tile_d, tile_s, eo), lambda d, s: (d, s, 0)),  # efeat out
                pl.BlockSpec((tile_d, tile_s), lambda d, s: (d, s)),       # attn out
            ],
            scratch_shapes=[
                pltpu.VMEM((tile_d, 1), jnp.float32),    # running max  m
                pltpu.VMEM((tile_d, 1), jnp.float32),    # running denom l
                pltpu.VMEM((tile_d, eo), jnp.float32),   # running weighted sum
                pltpu.VMEM((tile_d, 1), jnp.float32),    # cached sum(dst)
                pltpu.VMEM((tile_d, 1), jnp.float32),    # cached sum(dst^2)
                pltpu.VMEM((tile_d, eo), jnp.float32),   # cached dst @ We_dst
            ],
        ),
        compiler_params=pltpu.CompilerParams(
            dimension_semantics=("parallel", "arbitrary"),
            vmem_limit_bytes=vmem_limit,
        ),
    )(nfeat, nfeat, efeat,
      w_e_src, w_e_ef, w_e_dst, cs_we, b_e, wa_t,
      w_n_node, w_n_attn, cs_wn, b_n)

    E = N * N
    return {"nfeat": nfeat_new,
            "efeat": ef_new.reshape(E, eo),
            "attn": attn.reshape(E, 1)}


# -----------------------------------------------------------------------------
# Pure-JAX reference (same math) for the correctness check.
# -----------------------------------------------------------------------------
def _inorm(x):
    m = jnp.mean(x, axis=-1, keepdims=True)
    v = jnp.mean((x - m) ** 2, axis=-1, keepdims=True)
    return (x - m) / jnp.sqrt(v + EPS)


def _lrelu(x):
    return jnp.where(x > 0, x, NEG_SLOPE * x)


def reference(nfeat, efeat, params):
    N, node_n_in = nfeat.shape
    E = N * N
    src = jnp.tile(nfeat, (N, 1))
    dst = jnp.repeat(nfeat, N, axis=0)
    x = jnp.concatenate([src, efeat.reshape(E, -1), dst], axis=-1)
    y = _lrelu(_inorm(x) @ params["w_e"] + params["b_e"])
    attn = y @ params["w_attn"]
    Eo = y.shape[-1]
    attn2 = attn.reshape(N, N)
    alpha = jax.nn.softmax(attn2, axis=1)
    attn_feat = jnp.sum(alpha[:, :, None] * y.reshape(N, N, Eo), axis=1)
    xn = jnp.concatenate([nfeat, attn_feat], axis=-1)
    out = _lrelu(_inorm(xn) @ params["w_n"] + params["b_n"])
    return {"nfeat": out, "efeat": y, "attn": attn}


if __name__ == "__main__":
    # small shapes: N=8 nodes, complete graph -> E=64 edges
    N = 8
    node_n_in, node_n_out = 32, 32
    edge_n_in, edge_n_out = 64, 32
    Fe = edge_n_in + 2 * node_n_in   # 128
    Fn = node_n_in + edge_n_out      # 64

    key = jax.random.PRNGKey(0)
    k = jax.random.split(key, 7)
    nfeat = jax.random.normal(k[0], (N, node_n_in), jnp.float32)
    efeat = jax.random.normal(k[1], (N, N, edge_n_in), jnp.float32)

    params = {
        "w_e": 0.1 * jax.random.normal(k[2], (Fe, edge_n_out), jnp.float32),
        "b_e": 0.1 * jax.random.normal(k[3], (1, edge_n_out), jnp.float32),
        "w_attn": 0.1 * jax.random.normal(k[4], (edge_n_out, 1), jnp.float32),
        "w_n": 0.1 * jax.random.normal(k[5], (Fn, node_n_out), jnp.float32),
        "b_n": 0.1 * jax.random.normal(k[6], (1, node_n_out), jnp.float32),
    }

    out = jax.jit(functools.partial(message_passing_layer))(nfeat, efeat, params)
    jax.block_until_ready(out)

    # the kernel consumes efeat in bf16; feed the same rounded values to the reference
    efeat_seen = efeat.astype(jnp.bfloat16).astype(jnp.float32)
    ref = reference(nfeat, efeat_seen, params)

    # edge outputs are stored in bf16 -> compare with bf16-level tolerance;
    # node features stay f32 end-to-end -> tight tolerance.
    assert jnp.allclose(out["efeat"].astype(jnp.float32), ref["efeat"],
                        atol=2e-2, rtol=2e-2), "efeat"
    assert jnp.allclose(out["attn"].astype(jnp.float32), ref["attn"],
                        atol=2e-2, rtol=2e-2), "attn"
    assert jnp.allclose(out["nfeat"], ref["nfeat"], atol=2e-4, rtol=2e-4), "nfeat"

    print("KERNEL_OK")
</pallas_src>

<mosaic_0001>
module attributes {stable_mosaic.version = 11 : i64} {
  func.func @_fused_mpl_kernel(%arg0: i32, %arg1: i32, %arg2: memref<8x32xf32, #tpu.memory_space<vmem>>, %arg3: memref<8x32xf32, #tpu.memory_space<vmem>>, %arg4: memref<8x8x64xbf16, #tpu.memory_space<vmem>>, %arg5: memref<32x32xf32, #tpu.memory_space<vmem>>, %arg6: memref<64x32xf32, #tpu.memory_space<vmem>>, %arg7: memref<32x32xf32, #tpu.memory_space<vmem>>, %arg8: memref<1x32xf32, #tpu.memory_space<vmem>>, %arg9: memref<1x32xf32, #tpu.memory_space<vmem>>, %arg10: memref<1x32xf32, #tpu.memory_space<vmem>>, %arg11: memref<32x32xf32, #tpu.memory_space<vmem>>, %arg12: memref<32x32xf32, #tpu.memory_space<vmem>>, %arg13: memref<1x32xf32, #tpu.memory_space<vmem>>, %arg14: memref<1x32xf32, #tpu.memory_space<vmem>>, %arg15: memref<8x32xf32, #tpu.memory_space<vmem>>, %arg16: memref<8x8x32xbf16, #tpu.memory_space<vmem>>, %arg17: memref<8x8xbf16, #tpu.memory_space<vmem>>, %arg18: memref<8x1xf32, #tpu.memory_space<vmem>>, %arg19: memref<8x1xf32, #tpu.memory_space<vmem>>, %arg20: memref<8x32xf32, #tpu.memory_space<vmem>>, %arg21: memref<8x1xf32, #tpu.memory_space<vmem>>, %arg22: memref<8x1xf32, #tpu.memory_space<vmem>>, %arg23: memref<8x32xf32, #tpu.memory_space<vmem>>) attributes {dimension_semantics = [#tpu.dimension_semantics<parallel>, #tpu.dimension_semantics<arbitrary>], iteration_bounds = array<i64: 1, 1>, scalar_prefetch = 0 : i64, scratch_operands = 6 : i64, tpu.core_type = #tpu.core_type<tc>, window_params = [{transform_indices = @transform_0, window_bounds = array<i64: 8, 32>}, {transform_indices = @transform_1, window_bounds = array<i64: 8, 32>}, {transform_indices = @transform_2, window_bounds = array<i64: 8, 8, 64>}, {pipeline_mode = #tpu.pipeline_mode<synchronous>, transform_indices = @transform_3, window_bounds = array<i64: 32, 32>}, {pipeline_mode = #tpu.pipeline_mode<synchronous>, transform_indices = @transform_4, window_bounds = array<i64: 64, 32>}, {pipeline_mode = #tpu.pipeline_mode<synchronous>, transform_indices = @transform_5, window_bounds = array<i64: 32, 32>}, {pipeline_mode = #tpu.pipeline_mode<synchronous>, transform_indices = @transform_6, window_bounds = array<i64: 1, 32>}, {pipeline_mode = #tpu.pipeline_mode<synchronous>, transform_indices = @transform_7, window_bounds = array<i64: 1, 32>}, {pipeline_mode = #tpu.pipeline_mode<synchronous>, transform_indices = @transform_8, window_bounds = array<i64: 1, 32>}, {pipeline_mode = #tpu.pipeline_mode<synchronous>, transform_indices = @transform_9, window_bounds = array<i64: 32, 32>}, {pipeline_mode = #tpu.pipeline_mode<synchronous>, transform_indices = @transform_10, window_bounds = array<i64: 32, 32>}, {pipeline_mode = #tpu.pipeline_mode<synchronous>, transform_indices = @transform_11, window_bounds = array<i64: 1, 32>}, {pipeline_mode = #tpu.pipeline_mode<synchronous>, transform_indices = @transform_12, window_bounds = array<i64: 1, 32>}, {transform_indices = @transform_13, window_bounds = array<i64: 8, 32>}, {transform_indices = @transform_14, window_bounds = array<i64: 8, 8, 32>}, {transform_indices = @transform_15, window_bounds = array<i64: 8, 8>}]} {
    %c0 = arith.constant 0 : index
    %c0_0 = arith.constant 0 : index
    %0 = vector.load %arg2[%c0, %c0_0] : memref<8x32xf32, #tpu.memory_space<vmem>>, vector<8x32xf32>
    %c0_1 = arith.constant 0 : index
    %c0_2 = arith.constant 0 : index
    %c0_3 = arith.constant 0 : index
    %1 = vector.load %arg4[%c0_1, %c0_2, %c0_3] : memref<8x8x64xbf16, #tpu.memory_space<vmem>>, vector<8x8x64xbf16>
    %2 = arith.extf %1 : vector<8x8x64xbf16> to vector<8x8x64xf32>
    %c0_i32 = arith.constant 0 : i32
    %3 = arith.cmpi eq, %arg1, %c0_i32 : i32
    %4 = arith.extui %3 : i1 to i32
    %c0_i32_4 = arith.constant 0 : i32
    %5 = arith.cmpi ne, %4, %c0_i32_4 : i32
    scf.if %5 {
      %c0_54 = arith.constant 0 : index
      %c0_55 = arith.constant 0 : index
      %106 = vector.load %arg3[%c0_54, %c0_55] : memref<8x32xf32, #tpu.memory_space<vmem>>, vector<8x32xf32>
      %cst_56 = arith.constant dense<0.000000e+00> : vector<8xf32>
      %107 = vector.multi_reduction <add>, %106, %cst_56 [1] : vector<8x32xf32> to vector<8xf32>
      %108 = vector.shape_cast %107 : vector<8xf32> to vector<8x1xf32>
      %c0_57 = arith.constant 0 : index
      %c0_58 = arith.constant 0 : index
      %109 = vector.load %arg21[%c0_57, %c0_58] : memref<8x1xf32, #tpu.memory_space<vmem>>, vector<8x1xf32>
      tpu.vector_store %arg21[%c0_57, %c0_58], %108 {strides = array<i32>} : memref<8x1xf32, #tpu.memory_space<vmem>>, vector<8x1xf32>,
      %110 = arith.mulf %106, %106 : vector<8x32xf32>
      %cst_59 = arith.constant dense<0.000000e+00> : vector<8xf32>
      %111 = vector.multi_reduction <add>, %110, %cst_59 [1] : vector<8x32xf32> to vector<8xf32>
      %112 = vector.shape_cast %111 : vector<8xf32> to vector<8x1xf32>
      %c0_60 = arith.constant 0 : index
      %c0_61 = arith.constant 0 : index
      %113 = vector.load %arg22[%c0_60, %c0_61] : memref<8x1xf32, #tpu.memory_space<vmem>>, vector<8x1xf32>
      tpu.vector_store %arg22[%c0_60, %c0_61], %112 {strides = array<i32>} : memref<8x1xf32, #tpu.memory_space<vmem>>, vector<8x1xf32>,
      %c0_62 = arith.constant 0 : index
      %c0_63 = arith.constant 0 : index
      %114 = vector.load %arg7[%c0_62, %c0_63] : memref<32x32xf32, #tpu.memory_space<vmem>>, vector<32x32xf32>
      %cst_64 = arith.constant dense<0.000000e+00> : vector<8x32xf32>
      %115 = tpu.matmul %106, %114, %cst_64 {dimension_numbers = #tpu.dot_dimension_numbers<[1], [0], [0], [1], [0, 0, 1, 1], [], []>} : vector<8x32xf32>, vector<32x32xf32>, vector<8x32xf32> -> vector<8x32xf32>
      %c0_65 = arith.constant 0 : index
      %c0_66 = arith.constant 0 : index
      %116 = vector.load %arg23[%c0_65, %c0_66] : memref<8x32xf32, #tpu.memory_space<vmem>>, vector<8x32xf32>
      tpu.vector_store %arg23[%c0_65, %c0_66], %115 {strides = array<i32>} : memref<8x32xf32, #tpu.memory_space<vmem>>, vector<8x32xf32>,
      %cst_67 = arith.constant 0xFF800000 : f32
      %117 = vector.broadcast %cst_67 : f32 to vector<8x1xf32>
      %c0_68 = arith.constant 0 : index
      %c0_69 = arith.constant 0 : index
      %118 = vector.load %arg18[%c0_68, %c0_69] : memref<8x1xf32, #tpu.memory_space<vmem>>, vector<8x1xf32>
      tpu.vector_store %arg18[%c0_68, %c0_69], %117 {strides = array<i32>} : memref<8x1xf32, #tpu.memory_space<vmem>>, vector<8x1xf32>,
      %cst_70 = arith.constant 0.000000e+00 : f32
      %119 = vector.broadcast %cst_70 : f32 to vector<8x1xf32>
      %c0_71 = arith.constant 0 : index
      %c0_72 = arith.constant 0 : index
      %120 = vector.load %arg19[%c0_71, %c0_72] : memref<8x1xf32, #tpu.memory_space<vmem>>, vector<8x1xf32>
      tpu.vector_store %arg19[%c0_71, %c0_72], %119 {strides = array<i32>} : memref<8x1xf32, #tpu.memory_space<vmem>>, vector<8x1xf32>,
      %cst_73 = arith.constant 0.000000e+00 : f32
      %121 = vector.broadcast %cst_73 : f32 to vector<8x32xf32>
      %c0_74 = arith.constant 0 : index
      %c0_75 = arith.constant 0 : index
      %122 = vector.load %arg20[%c0_74, %c0_75] : memref<8x32xf32, #tpu.memory_space<vmem>>, vector<8x32xf32>
      tpu.vector_store %arg20[%c0_74, %c0_75], %121 {strides = array<i32>} : memref<8x32xf32, #tpu.memory_space<vmem>>, vector<8x32xf32>,
    } else {
    }
    %cst = arith.constant dense<0.000000e+00> : vector<8xf32>
    %6 = vector.multi_reduction <add>, %0, %cst [1] : vector<8x32xf32> to vector<8xf32>
    %7 = vector.shape_cast %6 : vector<8xf32> to vector<8x1xf32>
    %8 = arith.mulf %0, %0 : vector<8x32xf32>
    %cst_5 = arith.constant dense<0.000000e+00> : vector<8xf32>
    %9 = vector.multi_reduction <add>, %8, %cst_5 [1] : vector<8x32xf32> to vector<8xf32>
    %10 = vector.shape_cast %9 : vector<8xf32> to vector<8x1xf32>
    %cst_6 = arith.constant dense<0.000000e+00> : vector<8x8xf32>
    %11 = vector.multi_reduction <add>, %2, %cst_6 [2] : vector<8x8x64xf32> to vector<8x8xf32>
    %12 = vector.shape_cast %11 : vector<8x8xf32> to vector<8x8x1xf32>
    %13 = arith.mulf %2, %2 : vector<8x8x64xf32>
    %cst_7 = arith.constant dense<0.000000e+00> : vector<8x8xf32>
    %14 = vector.multi_reduction <add>, %13, %cst_7 [2] : vector<8x8x64xf32> to vector<8x8xf32>
    %15 = vector.shape_cast %14 : vector<8x8xf32> to vector<8x8x1xf32>
    %c0_8 = arith.constant 0 : index
    %c0_9 = arith.constant 0 : index
    %16 = vector.load %arg21[%c0_8, %c0_9] : memref<8x1xf32, #tpu.memory_space<vmem>>, vector<8x1xf32>
    %c0_10 = arith.constant 0 : index
    %c0_11 = arith.constant 0 : index
    %17 = vector.load %arg22[%c0_10, %c0_11] : memref<8x1xf32, #tpu.memory_space<vmem>>, vector<8x1xf32>
    %18 = vector.shape_cast %7 : vector<8x1xf32> to vector<1x8x1xf32>
    %19 = vector.broadcast %18 : vector<1x8x1xf32> to vector<8x8x1xf32>
    %20 = arith.addf %19, %12 : vector<8x8x1xf32>
    %21 = vector.shape_cast %16 : vector<8x1xf32> to vector<8x1x1xf32>
    %22 = vector.broadcast %21 : vector<8x1x1xf32> to vector<8x8x1xf32>
    %23 = arith.addf %20, %22 : vector<8x8x1xf32>
    %cst_12 = arith.constant 1.280000e+02 : f32
    %24 = vector.broadcast %cst_12 : f32 to vector<8x8x1xf32>
    %25 = arith.divf %23, %24 : vector<8x8x1xf32>
    %26 = vector.shape_cast %10 : vector<8x1xf32> to vector<1x8x1xf32>
    %27 = vector.broadcast %26 : vector<1x8x1xf32> to vector<8x8x1xf32>
    %28 = arith.addf %27, %15 : vector<8x8x1xf32>
    %29 = vector.shape_cast %17 : vector<8x1xf32> to vector<8x1x1xf32>
    %30 = vector.broadcast %29 : vector<8x1x1xf32> to vector<8x8x1xf32>
    %31 = arith.addf %28, %30 : vector<8x8x1xf32>
    %cst_13 = arith.constant 1.280000e+02 : f32
    %32 = vector.broadcast %cst_13 : f32 to vector<8x8x1xf32>
    %33 = arith.divf %31, %32 : vector<8x8x1xf32>
    %34 = arith.mulf %25, %25 : vector<8x8x1xf32>
    %35 = arith.subf %33, %34 : vector<8x8x1xf32>
    %cst_14 = arith.constant 0.000000e+00 : f32
    %36 = vector.broadcast %cst_14 : f32 to vector<8x8x1xf32>
    %37 = arith.maximumf %35, %36 : vector<8x8x1xf32>
    %cst_15 = arith.constant 9.99999974E-6 : f32
    %38 = vector.broadcast %cst_15 : f32 to vector<8x8x1xf32>
    %39 = arith.addf %37, %38 : vector<8x8x1xf32>
    %40 = math.rsqrt %39 : vector<8x8x1xf32>
    %c0_16 = arith.constant 0 : index
    %c0_17 = arith.constant 0 : index
    %41 = vector.load %arg5[%c0_16, %c0_17] : memref<32x32xf32, #tpu.memory_space<vmem>>, vector<32x32xf32>
    %cst_18 = arith.constant dense<0.000000e+00> : vector<8x32xf32>
    %42 = tpu.matmul %0, %41, %cst_18 {dimension_numbers = #tpu.dot_dimension_numbers<[1], [0], [0], [1], [0, 0, 1, 1], [], []>} : vector<8x32xf32>, vector<32x32xf32>, vector<8x32xf32> -> vector<8x32xf32>
    %43 = vector.shape_cast %2 : vector<8x8x64xf32> to vector<64x64xf32>
    %c0_19 = arith.constant 0 : index
    %c0_20 = arith.constant 0 : index
    %44 = vector.load %arg6[%c0_19, %c0_20] : memref<64x32xf32, #tpu.memory_space<vmem>>, vector<64x32xf32>
    %cst_21 = arith.constant dense<0.000000e+00> : vector<64x32xf32>
    %45 = tpu.matmul %43, %44, %cst_21 {dimension_numbers = #tpu.dot_dimension_numbers<[1], [0], [0], [1], [0, 0, 1, 1], [], []>} : vector<64x64xf32>, vector<64x32xf32>, vector<64x32xf32> -> vector<64x32xf32>
    %46 = vector.shape_cast %45 : vector<64x32xf32> to vector<8x8x32xf32>
    %47 = vector.shape_cast %42 : vector<8x32xf32> to vector<1x8x32xf32>
    %48 = vector.broadcast %47 : vector<1x8x32xf32> to vector<8x8x32xf32>
    %49 = arith.addf %46, %48 : vector<8x8x32xf32>
    %c0_22 = arith.constant 0 : index
    %c0_23 = arith.constant 0 : index
    %50 = vector.load %arg23[%c0_22, %c0_23] : memref<8x32xf32, #tpu.memory_space<vmem>>, vector<8x32xf32>
    %51 = vector.shape_cast %50 : vector<8x32xf32> to vector<8x1x32xf32>
    %52 = vector.broadcast %51 : vector<8x1x32xf32> to vector<8x8x32xf32>
    %53 = arith.addf %49, %52 : vector<8x8x32xf32>
    %c0_24 = arith.constant 0 : index
    %c0_25 = arith.constant 0 : index
    %54 = vector.load %arg8[%c0_24, %c0_25] : memref<1x32xf32, #tpu.memory_space<vmem>>, vector<1x32xf32>
    %55 = vector.shape_cast %54 : vector<1x32xf32> to vector<1x1x32xf32>
    %56 = vector.broadcast %25 : vector<8x8x1xf32> to vector<8x8x32xf32>
    %57 = vector.broadcast %55 : vector<1x1x32xf32> to vector<8x8x32xf32>
    %58 = arith.mulf %56, %57 : vector<8x8x32xf32>
    %59 = arith.subf %53, %58 : vector<8x8x32xf32>
    %60 = vector.broadcast %40 : vector<8x8x1xf32> to vector<8x8x32xf32>
    %61 = arith.mulf %60, %59 : vector<8x8x32xf32>
    %c0_26 = arith.constant 0 : index
    %c0_27 = arith.constant 0 : index
    %62 = vector.load %arg9[%c0_26, %c0_27] : memref<1x32xf32, #tpu.memory_space<vmem>>, vector<1x32xf32>
    %63 = vector.shape_cast %62 : vector<1x32xf32> to vector<1x1x32xf32>
    %64 = vector.broadcast %63 : vector<1x1x32xf32> to vector<8x8x32xf32>
    %65 = arith.addf %61, %64 : vector<8x8x32xf32>
    %cst_28 = arith.constant 0.00999999977 : f32
    %66 = vector.broadcast %cst_28 : f32 to vector<8x8x32xf32>
    %67 = arith.mulf %66, %65 : vector<8x8x32xf32>
    %68 = arith.maximumf %65, %67 : vector<8x8x32xf32>
    %c0_29 = arith.constant 0 : index
    %c0_30 = arith.constant 0 : index
    %69 = vector.load %arg10[%c0_29, %c0_30] : memref<1x32xf32, #tpu.memory_space<vmem>>, vector<1x32xf32>
    %70 = vector.shape_cast %69 : vector<1x32xf32> to vector<1x1x32xf32>
    %71 = vector.broadcast %70 : vector<1x1x32xf32> to vector<8x8x32xf32>
    %72 = arith.mulf %68, %71 : vector<8x8x32xf32>
    %cst_31 = arith.constant dense<0.000000e+00> : vector<8x8xf32>
    %73 = vector.multi_reduction <add>, %72, %cst_31 [2] : vector<8x8x32xf32> to vector<8x8xf32>
    %74 = arith.truncf %68 : vector<8x8x32xf32> to vector<8x8x32xbf16>
    %c0_32 = arith.constant 0 : index
    %c0_33 = arith.constant 0 : index
    %c0_34 = arith.constant 0 : index
    %75 = vector.load %arg16[%c0_32, %c0_33, %c0_34] : memref<8x8x32xbf16, #tpu.memory_space<vmem>>, vector<8x8x32xbf16>
    tpu.vector_store %arg16[%c0_32, %c0_33, %c0_34], %74 {strides = array<i32>} : memref<8x8x32xbf16, #tpu.memory_space<vmem>>, vector<8x8x32xbf16>,
    %76 = arith.truncf %73 : vector<8x8xf32> to vector<8x8xbf16>
    %c0_35 = arith.constant 0 : index
    %c0_36 = arith.constant 0 : index
    %77 = vector.load %arg17[%c0_35, %c0_36] : memref<8x8xbf16, #tpu.memory_space<vmem>>, vector<8x8xbf16>
    tpu.vector_store %arg17[%c0_35, %c0_36], %76 {strides = array<i32>} : memref<8x8xbf16, #tpu.memory_space<vmem>>, vector<8x8xbf16>,
    %c0_37 = arith.constant 0 : index
    %c0_38 = arith.constant 0 : index
    %78 = vector.load %arg18[%c0_37, %c0_38] : memref<8x1xf32, #tpu.memory_space<vmem>>, vector<8x1xf32>
    %cst_39 = arith.constant dense<0xFF800000> : vector<8xf32>
    %79 = vector.multi_reduction <maximumf>, %73, %cst_39 [1] : vector<8x8xf32> to vector<8xf32>
    %80 = vector.shape_cast %79 : vector<8xf32> to vector<8x1xf32>
    %81 = arith.maximumf %78, %80 : vector<8x1xf32>
    %82 = arith.subf %78, %81 : vector<8x1xf32>
    %83 = math.exp %82 : vector<8x1xf32>
    %84 = vector.broadcast %81 : vector<8x1xf32> to vector<8x8xf32>
    %85 = arith.subf %73, %84 : vector<8x8xf32>
    %86 = math.exp %85 : vector<8x8xf32>
    %c0_40 = arith.constant 0 : index
    %c0_41 = arith.constant 0 : index
    %87 = vector.load %arg19[%c0_40, %c0_41] : memref<8x1xf32, #tpu.memory_space<vmem>>, vector<8x1xf32>
    %88 = arith.mulf %83, %87 : vector<8x1xf32>
    %cst_42 = arith.constant dense<0.000000e+00> : vector<8xf32>
    %89 = vector.multi_reduction <add>, %86, %cst_42 [1] : vector<8x8xf32> to vector<8xf32>
    %90 = vector.shape_cast %89 : vector<8xf32> to vector<8x1xf32>
    %91 = arith.addf %88, %90 : vector<8x1xf32>
    %c0_43 = arith.constant 0 : index
    %c0_44 = arith.constant 0 : index
    %92 = vector.load %arg19[%c0_43, %c0_44] : memref<8x1xf32, #tpu.memory_space<vmem>>, vector<8x1xf32>
    tpu.vector_store %arg19[%c0_43, %c0_44], %91 {strides = array<i32>} : memref<8x1xf32, #tpu.memory_space<vmem>>, vector<8x1xf32>,
    %c0_45 = arith.constant 0 : index
    %c0_46 = arith.constant 0 : index
    %93 = vector.load %arg20[%c0_45, %c0_46] : memref<8x32xf32, #tpu.memory_space<vmem>>, vector<8x32xf32>
    %94 = vector.broadcast %83 : vector<8x1xf32> to vector<8x32xf32>
    %95 = arith.mulf %94, %93 : vector<8x32xf32>
    %96 = vector.shape_cast %86 : vector<8x8xf32> to vector<8x8x1xf32>
    %97 = vector.broadcast %96 : vector<8x8x1xf32> to vector<8x8x32xf32>
    %98 = arith.mulf %97, %68 : vector<8x8x32xf32>
    %cst_47 = arith.constant dense<0.000000e+00> : vector<8x32xf32>
    %99 = vector.multi_reduction <add>, %98, %cst_47 [1] : vector<8x8x32xf32> to vector<8x32xf32>
    %100 = arith.addf %95, %99 : vector<8x32xf32>
    %c0_48 = arith.constant 0 : index
    %c0_49 = arith.constant 0 : index
    %101 = vector.load %arg20[%c0_48, %c0_49] : memref<8x32xf32, #tpu.memory_space<vmem>>, vector<8x32xf32>
    tpu.vector_store %arg20[%c0_48, %c0_49], %100 {strides = array<i32>} : memref<8x32xf32, #tpu.memory_space<vmem>>, vector<8x32xf32>,
    %c0_50 = arith.constant 0 : index
    %c0_51 = arith.constant 0 : index
    %102 = vector.load %arg18[%c0_50, %c0_51] : memref<8x1xf32, #tpu.memory_space<vmem>>, vector<8x1xf32>
    tpu.vector_store %arg18[%c0_50, %c0_51], %81 {strides = array<i32>} : memref<8x1xf32, #tpu.memory_space<vmem>>, vector<8x1xf32>,
    %c0_i32_52 = arith.constant 0 : i32
    %103 = arith.cmpi eq, %arg1, %c0_i32_52 : i32
    %104 = arith.extui %103 : i1 to i32
    %c0_i32_53 = arith.constant 0 : i32
    %105 = arith.cmpi ne, %104, %c0_i32_53 : i32
    scf.if %105 {
      %c0_54 = arith.constant 0 : index
      %c0_55 = arith.constant 0 : index
      %106 = vector.load %arg3[%c0_54, %c0_55] : memref<8x32xf32, #tpu.memory_space<vmem>>, vector<8x32xf32>
      %c0_56 = arith.constant 0 : index
      %c0_57 = arith.constant 0 : index
      %107 = vector.load %arg20[%c0_56, %c0_57] : memref<8x32xf32, #tpu.memory_space<vmem>>, vector<8x32xf32>
      %c0_58 = arith.constant 0 : index
      %c0_59 = arith.constant 0 : index
      %108 = vector.load %arg19[%c0_58, %c0_59] : memref<8x1xf32, #tpu.memory_space<vmem>>, vector<8x1xf32>
      %109 = tpu.reciprocal %108 : vector<8x1xf32> -> vector<8x1xf32>
      %110 = vector.broadcast %109 : vector<8x1xf32> to vector<8x32xf32>
      %111 = arith.mulf %107, %110 : vector<8x32xf32>
      %c0_60 = arith.constant 0 : index
      %c0_61 = arith.constant 0 : index
      %112 = vector.load %arg21[%c0_60, %c0_61] : memref<8x1xf32, #tpu.memory_space<vmem>>, vector<8x1xf32>
      %cst_62 = arith.constant dense<0.000000e+00> : vector<8xf32>
      %113 = vector.multi_reduction <add>, %111, %cst_62 [1] : vector<8x32xf32> to vector<8xf32>
      %114 = vector.shape_cast %113 : vector<8xf32> to vector<8x1xf32>
      %115 = arith.addf %112, %114 : vector<8x1xf32>
      %cst_63 = arith.constant 6.400000e+01 : f32
      %116 = vector.broadcast %cst_63 : f32 to vector<8x1xf32>
      %117 = arith.divf %115, %116 : vector<8x1xf32>
      %c0_64 = arith.constant 0 : index
      %c0_65 = arith.constant 0 : index
      %118 = vector.load %arg22[%c0_64, %c0_65] : memref<8x1xf32, #tpu.memory_space<vmem>>, vector<8x1xf32>
      %119 = arith.mulf %111, %111 : vector<8x32xf32>
      %cst_66 = arith.constant dense<0.000000e+00> : vector<8xf32>
      %120 = vector.multi_reduction <add>, %119, %cst_66 [1] : vector<8x32xf32> to vector<8xf32>
      %121 = vector.shape_cast %120 : vector<8xf32> to vector<8x1xf32>
      %122 = arith.addf %118, %121 : vector<8x1xf32>
      %cst_67 = arith.constant 6.400000e+01 : f32
      %123 = vector.broadcast %cst_67 : f32 to vector<8x1xf32>
      %124 = arith.divf %122, %123 : vector<8x1xf32>
      %125 = arith.mulf %117, %117 : vector<8x1xf32>
      %126 = arith.subf %124, %125 : vector<8x1xf32>
      %cst_68 = arith.constant 0.000000e+00 : f32
      %127 = vector.broadcast %cst_68 : f32 to vector<8x1xf32>
      %128 = arith.maximumf %126, %127 : vector<8x1xf32>
      %cst_69 = arith.constant 9.99999974E-6 : f32
      %129 = vector.broadcast %cst_69 : f32 to vector<8x1xf32>
      %130 = arith.addf %128, %129 : vector<8x1xf32>
      %131 = math.rsqrt %130 : vector<8x1xf32>
      %c0_70 = arith.constant 0 : index
      %c0_71 = arith.constant 0 : index
      %132 = vector.load %arg11[%c0_70, %c0_71] : memref<32x32xf32, #tpu.memory_space<vmem>>, vector<32x32xf32>
      %cst_72 = arith.constant dense<0.000000e+00> : vector<8x32xf32>
      %133 = tpu.matmul %106, %132, %cst_72 {dimension_numbers = #tpu.dot_dimension_numbers<[1], [0], [0], [1], [0, 0, 1, 1], [], []>} : vector<8x32xf32>, vector<32x32xf32>, vector<8x32xf32> -> vector<8x32xf32>
      %c0_73 = arith.constant 0 : index
      %c0_74 = arith.constant 0 : index
      %134 = vector.load %arg12[%c0_73, %c0_74] : memref<32x32xf32, #tpu.memory_space<vmem>>, vector<32x32xf32>
      %cst_75 = arith.constant dense<0.000000e+00> : vector<8x32xf32>
      %135 = tpu.matmul %111, %134, %cst_75 {dimension_numbers = #tpu.dot_dimension_numbers<[1], [0], [0], [1], [0, 0, 1, 1], [], []>} : vector<8x32xf32>, vector<32x32xf32>, vector<8x32xf32> -> vector<8x32xf32>
      %136 = arith.addf %133, %135 : vector<8x32xf32>
      %c0_76 = arith.constant 0 : index
      %c0_77 = arith.constant 0 : index
      %137 = vector.load %arg13[%c0_76, %c0_77] : memref<1x32xf32, #tpu.memory_space<vmem>>, vector<1x32xf32>
      %138 = vector.broadcast %117 : vector<8x1xf32> to vector<8x32xf32>
      %139 = vector.broadcast %137 : vector<1x32xf32> to vector<8x32xf32>
      %140 = arith.mulf %138, %139 : vector<8x32xf32>
      %141 = arith.subf %136, %140 : vector<8x32xf32>
      %142 = vector.broadcast %131 : vector<8x1xf32> to vector<8x32xf32>
      %143 = arith.mulf %142, %141 : vector<8x32xf32>
      %c0_78 = arith.constant 0 : index
      %c0_79 = arith.constant 0 : index
      %144 = vector.load %arg14[%c0_78, %c0_79] : memref<1x32xf32, #tpu.memory_space<vmem>>, vector<1x32xf32>
      %145 = vector.broadcast %144 : vector<1x32xf32> to vector<8x32xf32>
      %146 = arith.addf %143, %145 : vector<8x32xf32>
      %cst_80 = arith.constant 0.00999999977 : f32
      %147 = vector.broadcast %cst_80 : f32 to vector<8x32xf32>
      %148 = arith.mulf %147, %146 : vector<8x32xf32>
      %149 = arith.maximumf %146, %148 : vector<8x32xf32>
      %c0_81 = arith.constant 0 : index
      %c0_82 = arith.constant 0 : index
      %150 = vector.load %arg15[%c0_81, %c0_82] : memref<8x32xf32, #tpu.memory_space<vmem>>, vector<8x32xf32>
      tpu.vector_store %arg15[%c0_81, %c0_82], %149 {strides = array<i32>} : memref<8x32xf32, #tpu.memory_space<vmem>>, vector<8x32xf32>,
    } else {
    }
    return
  }
  func.func @transform_0(%arg0: i32, %arg1: i32) -> (i32, i32) {
    %c0_i32 = arith.constant 0 : i32
    %c0_i32_0 = arith.constant 0 : i32
    return %arg1, %c0_i32 : i32, i32
  }
  func.func @transform_1(%arg0: i32, %arg1: i32) -> (i32, i32) {
    %c0_i32 = arith.constant 0 : i32
    %c0_i32_0 = arith.constant 0 : i32
    return %arg0, %c0_i32 : i32, i32
  }
  func.func @transform_2(%arg0: i32, %arg1: i32) -> (i32, i32, i32) {
    %c0_i32 = arith.constant 0 : i32
    %c0_i32_0 = arith.constant 0 : i32
    return %arg0, %arg1, %c0_i32 : i32, i32, i32
  }
  func.func @transform_3(%arg0: i32, %arg1: i32) -> (i32, i32) {
    %c0_i32 = arith.constant 0 : i32
    %c0_i32_0 = arith.constant 0 : i32
    %c0_i32_1 = arith.constant 0 : i32
    return %c0_i32, %c0_i32_0 : i32, i32
  }
  func.func @transform_4(%arg0: i32, %arg1: i32) -> (i32, i32) {
    %c0_i32 = arith.constant 0 : i32
    %c0_i32_0 = arith.constant 0 : i32
    %c0_i32_1 = arith.constant 0 : i32
    return %c0_i32, %c0_i32_0 : i32, i32
  }
  func.func @transform_5(%arg0: i32, %arg1: i32) -> (i32, i32) {
    %c0_i32 = arith.constant 0 : i32
    %c0_i32_0 = arith.constant 0 : i32
    %c0_i32_1 = arith.constant 0 : i32
    return %c0_i32, %c0_i32_0 : i32, i32
  }
  func.func @transform_6(%arg0: i32, %arg1: i32) -> (i32, i32) {
    %c0_i32 = arith.constant 0 : i32
    %c0_i32_0 = arith.constant 0 : i32
    %c0_i32_1 = arith.constant 0 : i32
    return %c0_i32, %c0_i32_0 : i32, i32
  }
  func.func @transform_7(%arg0: i32, %arg1: i32) -> (i32, i32) {
    %c0_i32 = arith.constant 0 : i32
    %c0_i32_0 = arith.constant 0 : i32
    %c0_i32_1 = arith.constant 0 : i32
    return %c0_i32, %c0_i32_0 : i32, i32
  }
  func.func @transform_8(%arg0: i32, %arg1: i32) -> (i32, i32) {
    %c0_i32 = arith.constant 0 : i32
    %c0_i32_0 = arith.constant 0 : i32
    %c0_i32_1 = arith.constant 0 : i32
    return %c0_i32, %c0_i32_0 : i32, i32
  }
  func.func @transform_9(%arg0: i32, %arg1: i32) -> (i32, i32) {
    %c0_i32 = arith.constant 0 : i32
    %c0_i32_0 = arith.constant 0 : i32
    %c0_i32_1 = arith.constant 0 : i32
    return %c0_i32, %c0_i32_0 : i32, i32
  }
  func.func @transform_10(%arg0: i32, %arg1: i32) -> (i32, i32) {
    %c0_i32 = arith.constant 0 : i32
    %c0_i32_0 = arith.constant 0 : i32
    %c0_i32_1 = arith.constant 0 : i32
    return %c0_i32, %c0_i32_0 : i32, i32
  }
  func.func @transform_11(%arg0: i32, %arg1: i32) -> (i32, i32) {
    %c0_i32 = arith.constant 0 : i32
    %c0_i32_0 = arith.constant 0 : i32
    %c0_i32_1 = arith.constant 0 : i32
    return %c0_i32, %c0_i32_0 : i32, i32
  }
  func.func @transform_12(%arg0: i32, %arg1: i32) -> (i32, i32) {
    %c0_i32 = arith.constant 0 : i32
    %c0_i32_0 = arith.constant 0 : i32
    %c0_i32_1 = arith.constant 0 : i32
    return %c0_i32, %c0_i32_0 : i32, i32
  }
  func.func @transform_13(%arg0: i32, %arg1: i32) -> (i32, i32) {
    %c0_i32 = arith.constant 0 : i32
    %c0_i32_0 = arith.constant 0 : i32
    return %arg0, %c0_i32 : i32, i32
  }
  func.func @transform_14(%arg0: i32, %arg1: i32) -> (i32, i32, i32) {
    %c0_i32 = arith.constant 0 : i32
    %c0_i32_0 = arith.constant 0 : i32
    return %arg0, %arg1, %c0_i32 : i32, i32, i32
  }
  func.func @transform_15(%arg0: i32, %arg1: i32) -> (i32, i32) {
    %c0_i32 = arith.constant 0 : i32
    return %arg0, %arg1 : i32, i32
  }
}

</mosaic_0001>

<llo_original>
// kernel: message_passing_layer.1
$region0: #{message_passing_layer.1}
  #allocation0 [shape = 'u32[]', space=smem, size = 0x4, offset = 0x4, fixed_abs, tag = 'smem constant byte address 0x4 - core index']
  #allocation1 [shape = 'u32[72,128]{1,0:T(1,128)}', space=vmem, size = 0x9000, scoped, tag = 'internal scratch']
  #allocation2 [shape = 'f32[8,1]{1,0:T(8,128)}', space=vmem, size = 0x1000, scoped, tag = 'scratch operand']
  #allocation3 [shape = 'f32[8,1]{1,0:T(8,128)}', space=vmem, size = 0x1000, scoped, tag = 'scratch operand']
  #allocation4 [shape = 'f32[8,32]{1,0:T(8,128)}', space=vmem, size = 0x1000, scoped, tag = 'scratch operand']
  #allocation5 [shape = 'f32[8,1]{1,0:T(8,128)}', space=vmem, size = 0x1000, scoped, tag = 'scratch operand']
  #allocation6 [shape = 'f32[8,1]{1,0:T(8,128)}', space=vmem, size = 0x1000, scoped, tag = 'scratch operand']
  #allocation7 [shape = 'f32[8,32]{1,0:T(8,128)}', space=vmem, size = 0x1000, scoped, tag = 'scratch operand']
  %s0 = inlined_call_operand.vmem [shape: f32[8,32], index: 0, kind: input, shape index: {}, may-alias: {0,1}]
  %s1 = inlined_call_operand.vmem [shape: f32[8,32], index: 1, kind: input, shape index: {}, may-alias: {0,1}]
  %s2 = inlined_call_operand.vmem [shape: bf16[8,8,64], index: 2, kind: input, shape index: {}]
  %s3 = inlined_call_operand.vmem [shape: f32[32,32], index: 3, kind: input, shape index: {}]
  %s4 = inlined_call_operand.vmem [shape: f32[64,32], index: 4, kind: input, shape index: {}]
  %s5 = inlined_call_operand.vmem [shape: f32[32,32], index: 5, kind: input, shape index: {}]
  %s6 = inlined_call_operand.vmem [shape: f32[1,32], index: 6, kind: input, shape index: {}]
  %s7 = inlined_call_operand.vmem [shape: f32[1,32], index: 7, kind: input, shape index: {}]
  %s8 = inlined_call_operand.vmem [shape: f32[1,32], index: 8, kind: input, shape index: {}]
  %s9 = inlined_call_operand.vmem [shape: f32[32,32], index: 9, kind: input, shape index: {}]
  %s10 = inlined_call_operand.vmem [shape: f32[32,32], index: 10, kind: input, shape index: {}]
  %s11 = inlined_call_operand.vmem [shape: f32[1,32], index: 11, kind: input, shape index: {}]
  %s12 = inlined_call_operand.vmem [shape: f32[1,32], index: 12, kind: input, shape index: {}]
  %s13 = inlined_call_operand.hbm [shape: f32[8,32], index: 13, kind: output, shape index: {0}]
  %s14 = inlined_call_operand.vmem [shape: bf16[8,8,32], index: 14, kind: output, shape index: {1}]
  %s15 = inlined_call_operand.vmem [shape: bf16[8,8], index: 15, kind: output, shape index: {2}]
  %16 = xla_tuple %s13, %s14, %s15
  %s17 = sld [smem:[#allocation0]]
  $region86: #{message_passing_layer.1} parent=0
    _
  %s19 = ssub.s32 1, %s17
  %s20 = scalar_select 0, %s19, %s17
  $region1: #{message_passing_layer.1} parent=0
    #allocation8 [shape = 'u8[4096]{0}', space=vmem, size = 0x1000, scoped, tag = 'output window, operand 0, single buffered']
    #allocation9 [shape = 's32[1]{0}', space=sflag, size = 0x4, scoped, tag = 'scoped memory for message_passing_layer.1']
    %21 = vsyncpa [#allocation9], 0
    // Predicated region
    $region2: #{message_passing_layer.1} parent=1 // pred_check
      _
    $region3: #{message_passing_layer.1} parent=1 // pred_check_branch
      %23 = sbr.rel (0) target = $region5
    $region4: #{message_passing_layer.1} parent=1 // pred_region
      _
    $region5: #{message_passing_layer.1} parent=1 // pred_fallthru
      _
    // Predicated region
    $region6: #{message_passing_layer.1} parent=1 // pred_check
      _
    $region7: #{message_passing_layer.1} parent=1 // pred_check_branch
      %25 = sbr.rel (0) target = $region9
    $region8: #{message_passing_layer.1} parent=1 // pred_region
      _
    $region9: #{message_passing_layer.1} parent=1 // pred_fallthru
      _
    // Predicated region
    $region10: #{message_passing_layer.1} parent=1 // pred_check
      _
    $region11: #{message_passing_layer.1} parent=1 // pred_check_branch
      %27 = sbr.rel (0) target = $region13
    $region12: #{message_passing_layer.1} parent=1 // pred_region
      _
    $region13: #{message_passing_layer.1} parent=1 // pred_fallthru
      _
    // Predicated region
    $region14: #{message_passing_layer.1} parent=1 // pred_check
      _
    $region15: #{message_passing_layer.1} parent=1 // pred_check_branch
      %29 = sbr.rel (0) target = $region17
    $region16: #{message_passing_layer.1} parent=1 // pred_region
      _
    $region17: #{message_passing_layer.1} parent=1 // pred_fallthru
      _
    // Predicated region
    $region18: #{message_passing_layer.1} parent=1 // pred_check
      _
    $region19: #{message_passing_layer.1} parent=1 // pred_check_branch
      %31 = sbr.rel (0) target = $region21
    $region20: #{message_passing_layer.1} parent=1 // pred_region
      _
    $region21: #{message_passing_layer.1} parent=1 // pred_fallthru
      _
    // Predicated region
    $region22: #{message_passing_layer.1} parent=1 // pred_check
      _
    $region23: #{message_passing_layer.1} parent=1 // pred_check_branch
      %33 = sbr.rel (0) target = $region25
    $region24: #{message_passing_layer.1} parent=1 // pred_region
      _
    $region25: #{message_passing_layer.1} parent=1 // pred_fallthru
      _
    // Predicated region
    $region26: #{message_passing_layer.1} parent=1 // pred_check
      _
    $region27: #{message_passing_layer.1} parent=1 // pred_check_branch
      %35 = sbr.rel (0) target = $region29
    $region28: #{message_passing_layer.1} parent=1 // pred_region
      _
    $region29: #{message_passing_layer.1} parent=1 // pred_fallthru
      _
    // Predicated region
    $region30: #{message_passing_layer.1} parent=1 // pred_check
      _
    $region31: #{message_passing_layer.1} parent=1 // pred_check_branch
      %37 = sbr.rel (0) target = $region33
    $region32: #{message_passing_layer.1} parent=1 // pred_region
      _
    $region33: #{message_passing_layer.1} parent=1 // pred_fallthru
      _
    // Predicated region
    $region34: #{message_passing_layer.1} parent=1 // pred_check
      _
    $region35: #{message_passing_layer.1} parent=1 // pred_check_branch
      %39 = sbr.rel (0) target = $region37
    $region36: #{message_passing_layer.1} parent=1 // pred_region
      _
    $region37: #{message_passing_layer.1} parent=1 // pred_fallthru
      _
    // Predicated region
    $region38: #{message_passing_layer.1} parent=1 // pred_check
      _
    $region39: #{message_passing_layer.1} parent=1 // pred_check_branch
      %41 = sbr.rel (0) target = $region41
    $region40: #{message_passing_layer.1} parent=1 // pred_region
      _
    $region41: #{message_passing_layer.1} parent=1 // pred_fallthru
      _
    // Predicated region
    $region42: #{message_passing_layer.1} parent=1 // pred_check
      _
    $region43: #{message_passing_layer.1} parent=1 // pred_check_branch
      %43 = sbr.rel (0) target = $region45
    $region44: #{message_passing_layer.1} parent=1 // pred_region
      _
    $region45: #{message_passing_layer.1} parent=1 // pred_fallthru
      _
    // Predicated region
    $region46: #{message_passing_layer.1} parent=1 // pred_check
      _
    $region47: #{message_passing_layer.1} parent=1 // pred_check_branch
      %45 = sbr.rel (0) target = $region49
    $region48: #{message_passing_layer.1} parent=1 // pred_region
      _
    $region49: #{message_passing_layer.1} parent=1 // pred_fallthru
      _
    // Predicated region
    $region50: #{message_passing_layer.1} parent=1 // pred_check
      _
    $region51: #{message_passing_layer.1} parent=1 // pred_check_branch
      %47 = sbr.rel (0) target = $region53
    $region52: #{message_passing_layer.1} parent=1 // pred_region
      _
    $region53: #{message_passing_layer.1} parent=1 // pred_fallthru
      _
    %v48 = vld [vmem:[%s0] sm:$0xff]
    %v49 = vld [vmem:[%s2] sm:$0xf]
    %v50 = vld [vmem:[%s2 + $0x4] sm:$0xf]
    %v51 = vld [vmem:[%s2 + $0x8] sm:$0xf]
    %v52 = vld [vmem:[%s2 + $0xc] sm:$0xf]
    %v53 = vld [vmem:[%s2 + $0x10] sm:$0xf]
    %v54 = vld [vmem:[%s2 + $0x14] sm:$0xf]
    %v55 = vld [vmem:[%s2 + $0x18] sm:$0xf]
    %v56 = vld [vmem:[%s2 + $0x1c] sm:$0xf]
    %v57 = vunpack.c.l.bf16 %v49
    %v58 = vunpack.c.l.bf16 %v50
    %v59 = vunpack.c.l.bf16 %v51
    %v60 = vunpack.c.l.bf16 %v52
    %v61 = vunpack.c.l.bf16 %v53
    %v62 = vunpack.c.l.bf16 %v54
    %v63 = vunpack.c.l.bf16 %v55
    %v64 = vunpack.c.l.bf16 %v56
    %p65 = scmp.eq.s32.totalorder 0, 0
    // Predicated region
    $region54: #{message_passing_layer.1} parent=1 // pred_check
      %p66 = pneg %p65
    $region55: #{message_passing_layer.1} parent=1 // pred_check_branch
      %68 = sbr.rel (%p66) target = $region57
    $region56: #{message_passing_layer.1} parent=1 // pred_region
      %v69 = vld [vmem:[%s1] sm:$0xff]
      %vm70 = vcmask 261120
      %v71 = vsel %vm70, %v69, 0.0
      %72 = vadd.xlane.f32.xlu0 %v71
      %v73 = vpop.xlane.xlu0 %72
      %vm74 = vcmask 7168
      %75 = vst.msk [vmem:[#allocation5] sm:$0xff] %vm74, %v73
      %v76 = vmul.f32 %v69, %v69
      %v77 = vsel %vm70, %v76, 0.0
      %78 = vadd.xlane.f32.xlu0 %v77
      %v79 = vpop.xlane.xlu0 %78
      %80 = vst.msk [vmem:[#allocation6] sm:$0xff] %vm74, %v79
      %v81 = vld [vmem:[%s5] sm:$0xff]
      %v82 = vld [vmem:[%s5 + $0x8] sm:$0xff]
      %v83 = vld [vmem:[%s5 + $0x10] sm:$0xff]
      %v84 = vld [vmem:[%s5 + $0x18] sm:$0xff]
      %v86 = vsel %vm70, %v69, 0
      %88 = vmatpush.msra.mxu0 0.0
      %89 = vmatpush.msra.mxu0 0.0
      %90 = vmatpush.msra.mxu0 0.0
      %91 = vmatpush.msra.mxu0 0.0
      %92 = vmatpush.msra.mxu0 0.0
      %93 = vmatpush.msra.mxu0 0.0
      %94 = vmatpush.msra.mxu0 0.0
      %95 = vmatpush.msra.mxu0 0.0
      %96 = vmatpush.msra.mxu0 0.0
      %97 = vmatpush.msra.mxu0 0.0
      %98 = vmatpush.msra.mxu0 0.0
      %99 = vmatpush.msra.mxu0 0.0
      %100 = vmatpush.msra.mxu0 %v84
      %101 = vmatpush.msra.mxu0 %v83
      %102 = vmatpush.msra.mxu0 %v82
      %103 = vmatpush.msra.mxu0 %v81
      %104 = vmatmul.f32.gmra.mxu0 %v86
      %v105 = vpop.f32.mrf.mxu0
      %v106 = vadd.f32 0.0, %v105
      %107 = vdwg.mxu0
      %108 = vst.msk [vmem:[#allocation7] sm:$0xff] %vm70, %v106
      %109 = vst.msk [vmem:[#allocation2] sm:$0xff] %vm74, -inf
      %110 = vst.msk [vmem:[#allocation3] sm:$0xff] %vm74, 0.0
      %111 = vst.msk [vmem:[#allocation4] sm:$0xff] %vm70, 0.0
    $region57: #{message_passing_layer.1} parent=1 // pred_fallthru
      _
    %vm112 = vcmask 261120
    %v113 = vsel %vm112, %v48, 0.0
    %114 = vadd.xlane.f32.xlu0 %v113
    %v115 = vpop.xlane.xlu0 %114
    %v116 = vmul.f32 %v48, %v48
    %v117 = vsel %vm112, %v116, 0.0
    %118 = vadd.xlane.f32.xlu0 %v117
    %v119 = vpop.xlane.xlu0 %118
    %vm120 = vcmask 523264
    %v121 = vsel %vm120, %v57, 0.0
    %122 = vadd.xlane.f32.xlu0 %v121
    %v123 = vpop.xlane.xlu0 %122
    %v124 = vsel %vm120, %v58, 0.0
    %125 = vadd.xlane.f32.xlu0 %v124
    %v126 = vpop.xlane.xlu0 %125
    %v127 = vsel %vm120, %v59, 0.0
    %128 = vadd.xlane.f32.xlu0 %v127
    %v129 = vpop.xlane.xlu0 %128
    %v130 = vsel %vm120, %v60, 0.0
    %131 = vadd.xlane.f32.xlu0 %v130
    %v132 = vpop.xlane.xlu0 %131
    %v133 = vsel %vm120, %v61, 0.0
    %134 = vadd.xlane.f32.xlu0 %v133
    %v135 = vpop.xlane.xlu0 %134
    %v136 = vsel %vm120, %v62, 0.0
    %137 = vadd.xlane.f32.xlu0 %v136
    %v138 = vpop.xlane.xlu0 %137
    %v139 = vsel %vm120, %v63, 0.0
    %140 = vadd.xlane.f32.xlu0 %v139
    %v141 = vpop.xlane.xlu0 %140
    %v142 = vsel %vm120, %v64, 0.0
    %143 = vadd.xlane.f32.xlu0 %v142
    %v144 = vpop.xlane.xlu0 %143
    %v145 = vmul.f32 %v57, %v57
    %v146 = vmul.f32 %v58, %v58
    %v147 = vmul.f32 %v59, %v59
    %v148 = vmul.f32 %v60, %v60
    %v149 = vmul.f32 %v61, %v61
    %v150 = vmul.f32 %v62, %v62
    %v151 = vmul.f32 %v63, %v63
    %v152 = vmul.f32 %v64, %v64
    %v153 = vsel %vm120, %v145, 0.0
    %154 = vadd.xlane.f32.xlu0 %v153
    %v155 = vpop.xlane.xlu0 %154
    %v156 = vsel %vm120, %v146, 0.0
    %157 = vadd.xlane.f32.xlu0 %v156
    %v158 = vpop.xlane.xlu0 %157
    %v159 = vsel %vm120, %v147, 0.0
    %160 = vadd.xlane.f32.xlu0 %v159
    %v161 = vpop.xlane.xlu0 %160
    %v162 = vsel %vm120, %v148, 0.0
    %163 = vadd.xlane.f32.xlu0 %v162
    %v164 = vpop.xlane.xlu0 %163
    %v165 = vsel %vm120, %v149, 0.0
    %166 = vadd.xlane.f32.xlu0 %v165
    %v167 = vpop.xlane.xlu0 %166
    %v168 = vsel %vm120, %v150, 0.0
    %169 = vadd.xlane.f32.xlu0 %v168
    %v170 = vpop.xlane.xlu0 %169
    %v171 = vsel %vm120, %v151, 0.0
    %172 = vadd.xlane.f32.xlu0 %v171
    %v173 = vpop.xlane.xlu0 %172
    %v174 = vsel %vm120, %v152, 0.0
    %175 = vadd.xlane.f32.xlu0 %v174
    %v176 = vpop.xlane.xlu0 %175
    %v177 = vld [vmem:[#allocation5] sm:$0xff]
    %v178 = vld [vmem:[#allocation6] sm:$0xff]
    %v179 = vadd.f32 %v115, %v123
    %v180 = vadd.f32 %v115, %v126
    %v181 = vadd.f32 %v115, %v129
    %v182 = vadd.f32 %v115, %v132
    %v183 = vadd.f32 %v115, %v135
    %v184 = vadd.f32 %v115, %v138
    %v185 = vadd.f32 %v115, %v141
    %v186 = vadd.f32 %v115, %v144
    %v188 = vrot.slane %v177, 1
    %v189 = vrot.slane %v177, 2
    %v190 = vrot.slane %v177, 3
    %v191 = vrot.slane %v177, 4
    %v192 = vrot.slane %v177, 5
    %v193 = vrot.slane %v177, 6
    %v194 = vrot.slane %v177, 7
    %v195 = vperm.slane %v177, 0
    %v196 = vperm.slane %v188, 0
    %v197 = vperm.slane %v189, 0
    %v198 = vperm.slane %v190, 0
    %v199 = vperm.slane %v191, 0
    %v200 = vperm.slane %v192, 0
    %v201 = vperm.slane %v193, 0
    %v202 = vperm.slane %v194, 0
    %v211 = vadd.f32 %v179, %v195
    %v212 = vadd.f32 %v180, %v196
    %v213 = vadd.f32 %v181, %v197
    %v214 = vadd.f32 %v182, %v198
    %v215 = vadd.f32 %v183, %v199
    %v216 = vadd.f32 %v184, %v200
    %v217 = vadd.f32 %v185, %v201
    %v218 = vadd.f32 %v186, %v202
    %v219 = vrcp.pop 128.0
    %v220 = vmul.f32 128.0, %v219
    %v221 = vsub.f32 1.0, %v220
    %v222 = vmul.f32 %v219, %v221
    %v223 = vadd.f32 %v219, %v222
    %vm224 = vweird.f32 %v219
    %v225 = vsel %vm224, %v219, %v223
    %v226 = vmul.f32 %v211, %v225
    %v227 = vmul.f32 %v212, %v225
    %v228 = vmul.f32 %v213, %v225
    %v229 = vmul.f32 %v214, %v225
    %v230 = vmul.f32 %v215, %v225
    %v231 = vmul.f32 %v216, %v225
    %v232 = vmul.f32 %v217, %v225
    %v233 = vmul.f32 %v218, %v225
    %v234 = vadd.f32 %v119, %v155
    %v235 = vadd.f32 %v119, %v158
    %v236 = vadd.f32 %v119, %v161
    %v237 = vadd.f32 %v119, %v164
    %v238 = vadd.f32 %v119, %v167
    %v239 = vadd.f32 %v119, %v170
    %v240 = vadd.f32 %v119, %v173
    %v241 = vadd.f32 %v119, %v176
    %v243 = vrot.slane %v178, 1
    %v244 = vrot.slane %v178, 2
    %v245 = vrot.slane %v178, 3
    %v246 = vrot.slane %v178, 4
    %v247 = vrot.slane %v178, 5
    %v248 = vrot.slane %v178, 6
    %v249 = vrot.slane %v178, 7
    %v250 = vperm.slane %v178, 0
    %v251 = vperm.slane %v243, 0
    %v252 = vperm.slane %v244, 0
    %v253 = vperm.slane %v245, 0
    %v254 = vperm.slane %v246, 0
    %v255 = vperm.slane %v247, 0
    %v256 = vperm.slane %v248, 0
    %v257 = vperm.slane %v249, 0
    %v266 = vadd.f32 %v234, %v250
    %v267 = vadd.f32 %v235, %v251
    %v268 = vadd.f32 %v236, %v252
    %v269 = vadd.f32 %v237, %v253
    %v270 = vadd.f32 %v238, %v254
    %v271 = vadd.f32 %v239, %v255
    %v272 = vadd.f32 %v240, %v256
    %v273 = vadd.f32 %v241, %v257
    %v274 = vmul.f32 %v266, %v225
    %v275 = vmul.f32 %v267, %v225
    %v276 = vmul.f32 %v268, %v225
    %v277 = vmul.f32 %v269, %v225
    %v278 = vmul.f32 %v270, %v225
    %v279 = vmul.f32 %v271, %v225
    %v280 = vmul.f32 %v272, %v225
    %v281 = vmul.f32 %v273, %v225
    %v282 = vmul.f32 %v226, %v226
    %v283 = vmul.f32 %v227, %v227
    %v284 = vmul.f32 %v228, %v228
    %v285 = vmul.f32 %v229, %v229
    %v286 = vmul.f32 %v230, %v230
    %v287 = vmul.f32 %v231, %v231
    %v288 = vmul.f32 %v232, %v232
    %v289 = vmul.f32 %v233, %v233
    %v290 = vsub.f32 %v274, %v282
    %v291 = vsub.f32 %v275, %v283
    %v292 = vsub.f32 %v276, %v284
    %v293 = vsub.f32 %v277, %v285
    %v294 = vsub.f32 %v278, %v286
    %v295 = vsub.f32 %v279, %v287
    %v296 = vsub.f32 %v280, %v288
    %v297 = vsub.f32 %v281, %v289
    %v298 = vmax.f32 %v290, 0.0
    %v299 = vmax.f32 %v291, 0.0
    %v300 = vmax.f32 %v292, 0.0
    %v301 = vmax.f32 %v293, 0.0
    %v302 = vmax.f32 %v294, 0.0
    %v303 = vmax.f32 %v295, 0.0
    %v304 = vmax.f32 %v296, 0.0
    %v305 = vmax.f32 %v297, 0.0
    %v306 = vadd.f32 %v298, 1e-05
    %v307 = vadd.f32 %v299, 1e-05
    %v308 = vadd.f32 %v300, 1e-05
    %v309 = vadd.f32 %v301, 1e-05
    %v310 = vadd.f32 %v302, 1e-05
    %v311 = vadd.f32 %v303, 1e-05
    %v312 = vadd.f32 %v304, 1e-05
    %v313 = vadd.f32 %v305, 1e-05
    %v314 = vrsqrt.pop %v306
    %v315 = vmul.f32 %v314, %v306
    %v316 = vmul.f32 %v315, %v314
    %v317 = vmul.f32 0.5, %v316
    %v318 = vsub.f32 1.5, %v317
    %v319 = vmul.f32 %v314, %v318
    %vm320 = vweird.f32 %v306
    %vm321 = vweird.f32 %v314
    %vm322 = vmor %vm320, %vm321
    %v323 = vsel %vm322, %v314, %v319
    %v324 = vrsqrt.pop %v307
    %v325 = vmul.f32 %v324, %v307
    %v326 = vmul.f32 %v325, %v324
    %v327 = vmul.f32 0.5, %v326
    %v328 = vsub.f32 1.5, %v327
    %v329 = vmul.f32 %v324, %v328
    %vm330 = vweird.f32 %v307
    %vm331 = vweird.f32 %v324
    %vm332 = vmor %vm330, %vm331
    %v333 = vsel %vm332, %v324, %v329
    %v334 = vrsqrt.pop %v308
    %v335 = vmul.f32 %v334, %v308
    %v336 = vmul.f32 %v335, %v334
    %v337 = vmul.f32 0.5, %v336
    %v338 = vsub.f32 1.5, %v337
    %v339 = vmul.f32 %v334, %v338
    %vm340 = vweird.f32 %v308
    %vm341 = vweird.f32 %v334
    %vm342 = vmor %vm340, %vm341
    %v343 = vsel %vm342, %v334, %v339
    %v344 = vrsqrt.pop %v309
    %v345 = vmul.f32 %v344, %v309
    %v346 = vmul.f32 %v345, %v344
    %v347 = vmul.f32 0.5, %v346
    %v348 = vsub.f32 1.5, %v347
    %v349 = vmul.f32 %v344, %v348
    %vm350 = vweird.f32 %v309
    %vm351 = vweird.f32 %v344
    %vm352 = vmor %vm350, %vm351
    %v353 = vsel %vm352, %v344, %v349
    %v354 = vrsqrt.pop %v310
    %v355 = vmul.f32 %v354, %v310
    %v356 = vmul.f32 %v355, %v354
    %v357 = vmul.f32 0.5, %v356
    %v358 = vsub.f32 1.5, %v357
    %v359 = vmul.f32 %v354, %v358
    %vm360 = vweird.f32 %v310
    %vm361 = vweird.f32 %v354
    %vm362 = vmor %vm360, %vm361
    %v363 = vsel %vm362, %v354, %v359
    %v364 = vrsqrt.pop %v311
    %v365 = vmul.f32 %v364, %v311
    %v366 = vmul.f32 %v365, %v364
    %v367 = vmul.f32 0.5, %v366
    %v368 = vsub.f32 1.5, %v367
    %v369 = vmul.f32 %v364, %v368
    %vm370 = vweird.f32 %v311
    %vm371 = vweird.f32 %v364
    %vm372 = vmor %vm370, %vm371
    %v373 = vsel %vm372, %v364, %v369
    %v374 = vrsqrt.pop %v312
    %v375 = vmul.f32 %v374, %v312
    %v376 = vmul.f32 %v375, %v374
    %v377 = vmul.f32 0.5, %v376
    %v378 = vsub.f32 1.5, %v377
    %v379 = vmul.f32 %v374, %v378
    %vm380 = vweird.f32 %v312
    %vm381 = vweird.f32 %v374
    %vm382 = vmor %vm380, %vm381
    %v383 = vsel %vm382, %v374, %v379
    %v384 = vrsqrt.pop %v313
    %v385 = vmul.f32 %v384, %v313
    %v386 = vmul.f32 %v385, %v384
    %v387 = vmul.f32 0.5, %v386
    %v388 = vsub.f32 1.5, %v387
    %v389 = vmul.f32 %v384, %v388
    %vm390 = vweird.f32 %v313
    %vm391 = vweird.f32 %v384
    %vm392 = vmor %vm390, %vm391
    %v393 = vsel %vm392, %v384, %v389
    %v394 = vld [vmem:[%s3] sm:$0xff]
    %v395 = vld [vmem:[%s3 + $0x8] sm:$0xff]
    %v396 = vld [vmem:[%s3 + $0x10] sm:$0xff]
    %v397 = vld [vmem:[%s3 + $0x18] sm:$0xff]
    %v399 = vsel %vm112, %v48, 0
    %401 = vmatpush.msra.mxu0 0.0
    %402 = vmatpush.msra.mxu0 0.0
    %403 = vmatpush.msra.mxu0 0.0
    %404 = vmatpush.msra.mxu0 0.0
    %405 = vmatpush.msra.mxu0 0.0
    %406 = vmatpush.msra.mxu0 0.0
    %407 = vmatpush.msra.mxu0 0.0
    %408 = vmatpush.msra.mxu0 0.0
    %409 = vmatpush.msra.mxu0 0.0
    %410 = vmatpush.msra.mxu0 0.0
    %411 = vmatpush.msra.mxu0 0.0
    %412 = vmatpush.msra.mxu0 0.0
    %413 = vmatpush.msra.mxu0 %v397
    %414 = vmatpush.msra.mxu0 %v396
    %415 = vmatpush.msra.mxu0 %v395
    %416 = vmatpush.msra.mxu0 %v394
    %417 = vmatmul.f32.gmra.mxu0 %v399
    %v418 = vpop.f32.mrf.mxu0
    %v419 = vadd.f32 0.0, %v418
    %420 = vdwg.mxu0
    %v421 = vld [vmem:[%s4] sm:$0xff]
    %v422 = vld [vmem:[%s4 + $0x8] sm:$0xff]
    %v423 = vld [vmem:[%s4 + $0x10] sm:$0xff]
    %v424 = vld [vmem:[%s4 + $0x18] sm:$0xff]
    %v425 = vld [vmem:[%s4 + $0x20] sm:$0xff]
    %v426 = vld [vmem:[%s4 + $0x28] sm:$0xff]
    %v427 = vld [vmem:[%s4 + $0x30] sm:$0xff]
    %v428 = vld [vmem:[%s4 + $0x38] sm:$0xff]
    %v430 = vsel %vm120, %v57, 0
    %v433 = vsel %vm120, %v58, 0
    %v436 = vsel %vm120, %v59, 0
    %v439 = vsel %vm120, %v60, 0
    %v442 = vsel %vm120, %v61, 0
    %v445 = vsel %vm120, %v62, 0
    %v448 = vsel %vm120, %v63, 0
    %v451 = vsel %vm120, %v64, 0
    %453 = vmatpush.msra.mxu0 0.0
    %454 = vmatpush.msra.mxu0 0.0
    %455 = vmatpush.msra.mxu0 0.0
    %456 = vmatpush.msra.mxu0 0.0
    %457 = vmatpush.msra.mxu0 0.0
    %458 = vmatpush.msra.mxu0 0.0
    %459 = vmatpush.msra.mxu0 0.0
    %460 = vmatpush.msra.mxu0 0.0
    %461 = vmatpush.msra.mxu0 %v428
    %462 = vmatpush.msra.mxu0 %v427
    %463 = vmatpush.msra.mxu0 %v426
    %464 = vmatpush.msra.mxu0 %v425
    %465 = vmatpush.msra.mxu0 %v424
    %466 = vmatpush.msra.mxu0 %v423
    %467 = vmatpush.msra.mxu0 %v422
    %468 = vmatpush.msra.mxu0 %v421
    %469 = vmatmul.f32.gmra.mxu0 %v430
    %v470 = vpop.f32.mrf.mxu0
    %v471 = vadd.f32 0.0, %v470
    %472 = vmatmul.f32.gmra.mxu0 %v433
    %v473 = vpop.f32.mrf.mxu0
    %v474 = vadd.f32 0.0, %v473
    %475 = vmatmul.f32.gmra.mxu0 %v436
    %v476 = vpop.f32.mrf.mxu0
    %v477 = vadd.f32 0.0, %v476
    %478 = vmatmul.f32.gmra.mxu0 %v439
    %v479 = vpop.f32.mrf.mxu0
    %v480 = vadd.f32 0.0, %v479
    %481 = vmatmul.f32.gmra.mxu0 %v442
    %v482 = vpop.f32.mrf.mxu0
    %v483 = vadd.f32 0.0, %v482
    %484 = vmatmul.f32.gmra.mxu0 %v445
    %v485 = vpop.f32.mrf.mxu0
    %v486 = vadd.f32 0.0, %v485
    %487 = vmatmul.f32.gmra.mxu0 %v448
    %v488 = vpop.f32.mrf.mxu0
    %v489 = vadd.f32 0.0, %v488
    %490 = vmatmul.f32.gmra.mxu0 %v451
    %v491 = vpop.f32.mrf.mxu0
    %v492 = vadd.f32 0.0, %v491
    %493 = vdwg.mxu0
    %v494 = vadd.f32 %v471, %v419
    %v495 = vadd.f32 %v474, %v419
    %v496 = vadd.f32 %v477, %v419
    %v497 = vadd.f32 %v480, %v419
    %v498 = vadd.f32 %v483, %v419
    %v499 = vadd.f32 %v486, %v419
    %v500 = vadd.f32 %v489, %v419
    %v501 = vadd.f32 %v492, %v419
    %v502 = vld [vmem:[#allocation7] sm:$0xff]
    %v504 = vrot.slane %v502, 1
    %v505 = vrot.slane %v502, 2
    %v506 = vrot.slane %v502, 3
    %v507 = vrot.slane %v502, 4
    %v508 = vrot.slane %v502, 5
    %v509 = vrot.slane %v502, 6
    %v510 = vrot.slane %v502, 7
    %v511 = vperm.slane %v502, 0
    %v512 = vperm.slane %v504, 0
    %v513 = vperm.slane %v505, 0
    %v514 = vperm.slane %v506, 0
    %v515 = vperm.slane %v507, 0
    %v516 = vperm.slane %v508, 0
    %v517 = vperm.slane %v509, 0
    %v518 = vperm.slane %v510, 0
    %v527 = vadd.f32 %v494, %v511
    %v528 = vadd.f32 %v495, %v512
    %v529 = vadd.f32 %v496, %v513
    %v530 = vadd.f32 %v497, %v514
    %v531 = vadd.f32 %v498, %v515
    %v532 = vadd.f32 %v499, %v516
    %v533 = vadd.f32 %v500, %v517
    %v534 = vadd.f32 %v501, %v518
    %v535 = vld [vmem:[%s6] sm:$0x1]
    %537 = vset.pattern.permute.xlu0 0
    %538 = vperm.xlu0 %537, %v226
    %v539 = vpop.permute.xlu0 %538
    %542 = vset.pattern.permute.xlu0 0
    %543 = vperm.xlu0 %542, %v227
    %v544 = vpop.permute.xlu0 %543
    %547 = vset.pattern.permute.xlu0 0
    %548 = vperm.xlu0 %547, %v228
    %v549 = vpop.permute.xlu0 %548
    %552 = vset.pattern.permute.xlu0 0
    %553 = vperm.xlu0 %552, %v229
    %v554 = vpop.permute.xlu0 %553
    %557 = vset.pattern.permute.xlu0 0
    %558 = vperm.xlu0 %557, %v230
    %v559 = vpop.permute.xlu0 %558
    %562 = vset.pattern.permute.xlu0 0
    %563 = vperm.xlu0 %562, %v231
    %v564 = vpop.permute.xlu0 %563
    %567 = vset.pattern.permute.xlu0 0
    %568 = vperm.xlu0 %567, %v232
    %v569 = vpop.permute.xlu0 %568
    %572 = vset.pattern.permute.xlu0 0
    %573 = vperm.xlu0 %572, %v233
    %v574 = vpop.permute.xlu0 %573
    %v577 = vperm.slane %v535, 0
    %v579 = vmul.f32 %v539, %v577
    %v580 = vmul.f32 %v544, %v577
    %v581 = vmul.f32 %v549, %v577
    %v582 = vmul.f32 %v554, %v577
    %v583 = vmul.f32 %v559, %v577
    %v584 = vmul.f32 %v564, %v577
    %v585 = vmul.f32 %v569, %v577
    %v586 = vmul.f32 %v574, %v577
    %v587 = vsub.f32 %v527, %v579
    %v588 = vsub.f32 %v528, %v580
    %v589 = vsub.f32 %v529, %v581
    %v590 = vsub.f32 %v530, %v582
    %v591 = vsub.f32 %v531, %v583
    %v592 = vsub.f32 %v532, %v584
    %v593 = vsub.f32 %v533, %v585
    %v594 = vsub.f32 %v534, %v586
    %596 = vset.pattern.permute.xlu0 0
    %597 = vperm.xlu0 %596, %v323
    %v598 = vpop.permute.xlu0 %597
    %601 = vset.pattern.permute.xlu0 0
    %602 = vperm.xlu0 %601, %v333
    %v603 = vpop.permute.xlu0 %602
    %606 = vset.pattern.permute.xlu0 0
    %607 = vperm.xlu0 %606, %v343
    %v608 = vpop.permute.xlu0 %607
    %611 = vset.pattern.permute.xlu0 0
    %612 = vperm.xlu0 %611, %v353
    %v613 = vpop.permute.xlu0 %612
    %616 = vset.pattern.permute.xlu0 0
    %617 = vperm.xlu0 %616, %v363
    %v618 = vpop.permute.xlu0 %617
    %621 = vset.pattern.permute.xlu0 0
    %622 = vperm.xlu0 %621, %v373
    %v623 = vpop.permute.xlu0 %622
    %626 = vset.pattern.permute.xlu0 0
    %627 = vperm.xlu0 %626, %v383
    %v628 = vpop.permute.xlu0 %627
    %631 = vset.pattern.permute.xlu0 0
    %632 = vperm.xlu0 %631, %v393
    %v633 = vpop.permute.xlu0 %632
    %v635 = vmul.f32 %v598, %v587
    %v636 = vmul.f32 %v603, %v588
    %v637 = vmul.f32 %v608, %v589
    %v638 = vmul.f32 %v613, %v590
    %v639 = vmul.f32 %v618, %v591
    %v640 = vmul.f32 %v623, %v592
    %v641 = vmul.f32 %v628, %v593
    %v642 = vmul.f32 %v633, %v594
    %v643 = vld [vmem:[%s7] sm:$0x1]
    %v645 = vperm.slane %v643, 0
    %v647 = vadd.f32 %v635, %v645
    %v648 = vadd.f32 %v636, %v645
    %v649 = vadd.f32 %v637, %v645
    %v650 = vadd.f32 %v638, %v645
    %v651 = vadd.f32 %v639, %v645
    %v652 = vadd.f32 %v640, %v645
    %v653 = vadd.f32 %v641, %v645
    %v654 = vadd.f32 %v642, %v645
    %v655 = vmul.f32 %v647, 0.01
    %v656 = vmul.f32 %v648, 0.01
    %v657 = vmul.f32 %v649, 0.01
    %v658 = vmul.f32 %v650, 0.01
    %v659 = vmul.f32 %v651, 0.01
    %v660 = vmul.f32 %v652, 0.01
    %v661 = vmul.f32 %v653, 0.01
    %v662 = vmul.f32 %v654, 0.01
    %v663 = vmax.f32 %v647, %v655
    %v664 = vmax.f32 %v648, %v656
    %v665 = vmax.f32 %v649, %v657
    %v666 = vmax.f32 %v650, %v658
    %v667 = vmax.f32 %v651, %v659
    %v668 = vmax.f32 %v652, %v660
    %v669 = vmax.f32 %v653, %v661
    %v670 = vmax.f32 %v654, %v662
    %v671 = vld [vmem:[%s8] sm:$0x1]
    %v673 = vperm.slane %v671, 0
    %v675 = vmul.f32 %v663, %v673
    %v676 = vmul.f32 %v664, %v673
    %v677 = vmul.f32 %v665, %v673
    %v678 = vmul.f32 %v666, %v673
    %v679 = vmul.f32 %v667, %v673
    %v680 = vmul.f32 %v668, %v673
    %v681 = vmul.f32 %v669, %v673
    %v682 = vmul.f32 %v670, %v673
    %v683 = vsel %vm112, %v675, 0.0
    %684 = vadd.xlane.f32.xlu0 %v683
    %v685 = vpop.xlane.xlu0 %684
    %v686 = vsel %vm112, %v676, 0.0
    %687 = vadd.xlane.f32.xlu0 %v686
    %v688 = vpop.xlane.xlu0 %687
    %v689 = vsel %vm112, %v677, 0.0
    %690 = vadd.xlane.f32.xlu0 %v689
    %v691 = vpop.xlane.xlu0 %690
    %v692 = vsel %vm112, %v678, 0.0
    %693 = vadd.xlane.f32.xlu0 %v692
    %v694 = vpop.xlane.xlu0 %693
    %v695 = vsel %vm112, %v679, 0.0
    %696 = vadd.xlane.f32.xlu0 %v695
    %v697 = vpop.xlane.xlu0 %696
    %v698 = vsel %vm112, %v680, 0.0
    %699 = vadd.xlane.f32.xlu0 %v698
    %v700 = vpop.xlane.xlu0 %699
    %v701 = vsel %vm112, %v681, 0.0
    %702 = vadd.xlane.f32.xlu0 %v701
    %v703 = vpop.xlane.xlu0 %702
    %v704 = vsel %vm112, %v682, 0.0
    %705 = vadd.xlane.f32.xlu0 %v704
    %v706 = vpop.xlane.xlu0 %705
    %v707 = vpack.c.bf16 %v663, %v663
    %v708 = vpack.c.bf16 %v664, %v664
    %v709 = vpack.c.bf16 %v665, %v665
    %v710 = vpack.c.bf16 %v666, %v666
    %v711 = vpack.c.bf16 %v667, %v667
    %v712 = vpack.c.bf16 %v668, %v668
    %v713 = vpack.c.bf16 %v669, %v669
    %v714 = vpack.c.bf16 %v670, %v670
    %vm715 = vcmask 257024
    %716 = vst.msk [vmem:[%s14] sm:$0xf] %vm715, %v707
    %717 = vst.msk [vmem:[%s14 + $0x4] sm:$0xf] %vm715, %v708
    %718 = vst.msk [vmem:[%s14 + $0x8] sm:$0xf] %vm715, %v709
    %719 = vst.msk [vmem:[%s14 + $0xc] sm:$0xf] %vm715, %v710
    %720 = vst.msk [vmem:[%s14 + $0x10] sm:$0xf] %vm715, %v711
    %721 = vst.msk [vmem:[%s14 + $0x14] sm:$0xf] %vm715, %v712
    %722 = vst.msk [vmem:[%s14 + $0x18] sm:$0xf] %vm715, %v713
    %723 = vst.msk [vmem:[%s14 + $0x1c] sm:$0xf] %vm715, %v714
    %v724 = vpack.c.bf16 %v685, %v685
    %v725 = vpack.c.bf16 %v688, %v688
    %v726 = vpack.c.bf16 %v691, %v691
    %v727 = vpack.c.bf16 %v694, %v694
    %v728 = vpack.c.bf16 %v697, %v697
    %v729 = vpack.c.bf16 %v700, %v700
    %v730 = vpack.c.bf16 %v703, %v703
    %v731 = vpack.c.bf16 %v706, %v706
    %v740 = vunpack.c.l.b16 %v724
    %v741 = vunpack.c.l.b16 %v725
    %v742 = vunpack.c.l.b16 %v726
    %v743 = vunpack.c.l.b16 %v727
    %v744 = vunpack.c.l.b16 %v728
    %v745 = vunpack.c.l.b16 %v729
    %v746 = vunpack.c.l.b16 %v730
    %v747 = vunpack.c.l.b16 %v731
    %v748 = vlaneseq
    %v749 = vand.u32 %v748, 127
    %v750 = vperm.slane %v740, %v749
    %v751 = vperm.slane %v741, %v749
    %v752 = vperm.slane %v742, %v749
    %v753 = vperm.slane %v743, %v749
    %v754 = vperm.slane %v744, %v749
    %v755 = vperm.slane %v745, %v749
    %v756 = vperm.slane %v746, %v749
    %v757 = vperm.slane %v747, %v749
    %vm758 = vcmask 1041409
    %v759 = vsel %vm758, %v751, %v750
    %vm760 = vcmask 1042434
    %v761 = vsel %vm760, %v752, %v759
    %vm762 = vcmask 1043459
    %v763 = vsel %vm762, %v753, %v761
    %vm764 = vcmask 1044484
    %v765 = vsel %vm764, %v754, %v763
    %vm766 = vcmask 1045509
    %v767 = vsel %vm766, %v755, %v765
    %vm768 = vcmask 1046534
    %v769 = vsel %vm768, %v756, %v767
    %vm770 = vcmask 1047559
    %v771 = vsel %vm770, %v757, %v769
    %v772 = vpack.c.b16 %v771, %v771
    %vm774 = vcmask 60416
    %775 = vst.msk [vmem:[%s15] sm:$0xf] %vm774, %v772
    %v776 = vld [vmem:[#allocation2] sm:$0xff]
    %v785 = vperm.slane %v685, %v749
    %v786 = vperm.slane %v688, %v749
    %v787 = vperm.slane %v691, %v749
    %v788 = vperm.slane %v694, %v749
    %v789 = vperm.slane %v697, %v749
    %v790 = vperm.slane %v700, %v749
    %v791 = vperm.slane %v703, %v749
    %v792 = vperm.slane %v706, %v749
    %v793 = vsel %vm758, %v786, %v785
    %v794 = vsel %vm760, %v787, %v793
    %v795 = vsel %vm762, %v788, %v794
    %v796 = vsel %vm764, %v789, %v795
    %v797 = vsel %vm766, %v790, %v796
    %v798 = vsel %vm768, %v791, %v797
    %v799 = vsel %vm770, %v792, %v798
    %vm801 = vcmask 64512
    %v802 = vsel %vm801, %v799, -inf
    %803 = vmax.xlane.f32.xlu0 %v802
    %v804 = vpop.xlane.xlu0 %803
    %v805 = vmax.f32 %v776, %v804
    %v806 = vsub.f32 %v776, %v805
    %v807 = vmul.f32 %v806, 1.442695
    %v808 = vpow.pop %v807
    %810 = vset.pattern.permute.xlu0 0
    %811 = vperm.xlu0 %810, %v805
    %v812 = vpop.permute.xlu0 %811
    %v813 = vperm.slane %v812, 0
    %v814 = vperm.slane %v812, 1
    %v815 = vperm.slane %v812, 2
    %v816 = vperm.slane %v812, 3
    %v817 = vperm.slane %v812, 4
    %v818 = vperm.slane %v812, 5
    %v819 = vperm.slane %v812, 6
    %v820 = vperm.slane %v812, 7
    %v829 = vsub.f32 %v685, %v813
    %v830 = vsub.f32 %v688, %v814
    %v831 = vsub.f32 %v691, %v815
    %v832 = vsub.f32 %v694, %v816
    %v833 = vsub.f32 %v697, %v817
    %v834 = vsub.f32 %v700, %v818
    %v835 = vsub.f32 %v703, %v819
    %v836 = vsub.f32 %v706, %v820
    %v837 = vmul.f32 %v829, 1.442695
    %v838 = vpow.pop %v837
    %v839 = vmul.f32 %v830, 1.442695
    %v840 = vpow.pop %v839
    %v841 = vmul.f32 %v831, 1.442695
    %v842 = vpow.pop %v841
    %v843 = vmul.f32 %v832, 1.442695
    %v844 = vpow.pop %v843
    %v845 = vmul.f32 %v833, 1.442695
    %v846 = vpow.pop %v845
    %v847 = vmul.f32 %v834, 1.442695
    %v848 = vpow.pop %v847
    %v849 = vmul.f32 %v835, 1.442695
    %v850 = vpow.pop %v849
    %v851 = vmul.f32 %v836, 1.442695
    %v852 = vpow.pop %v851
    %v853 = vld [vmem:[#allocation3] sm:$0xff]
    %v854 = vmul.f32 %v808, %v853
    %863 = vset.pattern.permute.xlu0 0
    %864 = vperm.xlu0 %863, %v838
    %v865 = vpop.permute.xlu0 %864
    %866 = vset.pattern.permute.xlu0 0
    %867 = vperm.xlu0 %866, %v840
    %v868 = vpop.permute.xlu0 %867
    %869 = vset.pattern.permute.xlu0 0
    %870 = vperm.xlu0 %869, %v842
    %v871 = vpop.permute.xlu0 %870
    %872 = vset.pattern.permute.xlu0 0
    %873 = vperm.xlu0 %872, %v844
    %v874 = vpop.permute.xlu0 %873
    %875 = vset.pattern.permute.xlu0 0
    %876 = vperm.xlu0 %875, %v846
    %v877 = vpop.permute.xlu0 %876
    %878 = vset.pattern.permute.xlu0 0
    %879 = vperm.xlu0 %878, %v848
    %v880 = vpop.permute.xlu0 %879
    %881 = vset.pattern.permute.xlu0 0
    %882 = vperm.xlu0 %881, %v850
    %v883 = vpop.permute.xlu0 %882
    %884 = vset.pattern.permute.xlu0 0
    %885 = vperm.xlu0 %884, %v852
    %v886 = vpop.permute.xlu0 %885
    %v887 = vperm.slane %v865, %v749
    %v888 = vperm.slane %v868, %v749
    %v889 = vperm.slane %v871, %v749
    %v890 = vperm.slane %v874, %v749
    %v891 = vperm.slane %v877, %v749
    %v892 = vperm.slane %v880, %v749
    %v893 = vperm.slane %v883, %v749
    %v894 = vperm.slane %v886, %v749
    %v895 = vsel %vm758, %v888, %v887
    %v896 = vsel %vm760, %v889, %v895
    %v897 = vsel %vm762, %v890, %v896
    %v898 = vsel %vm764, %v891, %v897
    %v899 = vsel %vm766, %v892, %v898
    %v900 = vsel %vm768, %v893, %v899
    %v901 = vsel %vm770, %v894, %v900
    %v903 = vsel %vm801, %v901, 0.0
    %904 = vadd.xlane.f32.xlu0 %v903
    %v905 = vpop.xlane.xlu0 %904
    %v906 = vadd.f32 %v854, %v905
    %vm907 = vcmask 7168
    %908 = vst.msk [vmem:[#allocation3] sm:$0xff] %vm907, %v906
    %v909 = vld [vmem:[#allocation4] sm:$0xff]
    %911 = vset.pattern.permute.xlu0 0
    %912 = vperm.xlu0 %911, %v808
    %v913 = vpop.permute.xlu0 %912
    %v915 = vmul.f32 %v913, %v909
    %v924 = vmul.f32 %v865, %v663
    %v925 = vmul.f32 %v868, %v664
    %v926 = vmul.f32 %v871, %v665
    %v927 = vmul.f32 %v874, %v666
    %v928 = vmul.f32 %v877, %v667
    %v929 = vmul.f32 %v880, %v668
    %v930 = vmul.f32 %v883, %v669
    %v931 = vmul.f32 %v886, %v670
    %v932 = vsel %vm112, %v924, 0.0
    %v933 = vrot.slane %v932, 4
    %v934 = vadd.f32 %v932, %v933
    %v935 = vrot.slane %v934, 2
    %v936 = vadd.f32 %v934, %v935
    %v937 = vrot.slane %v936, 1
    %v938 = vadd.f32 %v936, %v937
    %v939 = vsel %vm112, %v925, 0.0
    %v940 = vrot.slane %v939, 4
    %v941 = vadd.f32 %v939, %v940
    %v942 = vrot.slane %v941, 2
    %v943 = vadd.f32 %v941, %v942
    %v944 = vrot.slane %v943, 1
    %v945 = vadd.f32 %v943, %v944
    %v946 = vsel %vm112, %v926, 0.0
    %v947 = vrot.slane %v946, 4
    %v948 = vadd.f32 %v946, %v947
    %v949 = vrot.slane %v948, 2
    %v950 = vadd.f32 %v948, %v949
    %v951 = vrot.slane %v950, 1
    %v952 = vadd.f32 %v950, %v951
    %v953 = vsel %vm112, %v927, 0.0
    %v954 = vrot.slane %v953, 4
    %v955 = vadd.f32 %v953, %v954
    %v956 = vrot.slane %v955, 2
    %v957 = vadd.f32 %v955, %v956
    %v958 = vrot.slane %v957, 1
    %v959 = vadd.f32 %v957, %v958
    %v960 = vsel %vm112, %v928, 0.0
    %v961 = vrot.slane %v960, 4
    %v962 = vadd.f32 %v960, %v961
    %v963 = vrot.slane %v962, 2
    %v964 = vadd.f32 %v962, %v963
    %v965 = vrot.slane %v964, 1
    %v966 = vadd.f32 %v964, %v965
    %v967 = vsel %vm112, %v929, 0.0
    %v968 = vrot.slane %v967, 4
    %v969 = vadd.f32 %v967, %v968
    %v970 = vrot.slane %v969, 2
    %v971 = vadd.f32 %v969, %v970
    %v972 = vrot.slane %v971, 1
    %v973 = vadd.f32 %v971, %v972
    %v974 = vsel %vm112, %v930, 0.0
    %v975 = vrot.slane %v974, 4
    %v976 = vadd.f32 %v974, %v975
    %v977 = vrot.slane %v976, 2
    %v978 = vadd.f32 %v976, %v977
    %v979 = vrot.slane %v978, 1
    %v980 = vadd.f32 %v978, %v979
    %v981 = vsel %vm112, %v931, 0.0
    %v982 = vrot.slane %v981, 4
    %v983 = vadd.f32 %v981, %v982
    %v984 = vrot.slane %v983, 2
    %v985 = vadd.f32 %v983, %v984
    %v986 = vrot.slane %v985, 1
    %v987 = vadd.f32 %v985, %v986
    %v996 = vsel %vm758, %v945, %v938
    %v997 = vsel %vm760, %v952, %v996
    %v998 = vsel %vm762, %v959, %v997
    %v999 = vsel %vm764, %v966, %v998
    %v1000 = vsel %vm766, %v973, %v999
    %v1001 = vsel %vm768, %v980, %v1000
    %v1002 = vsel %vm770, %v987, %v1001
    %v1004 = vadd.f32 %v915, %v1002
    %1005 = vst.msk [vmem:[#allocation4] sm:$0xff] %vm112, %v1004
    %1006 = vst.msk [vmem:[#allocation2] sm:$0xff] %vm907, %v805
    // Predicated region
    $region58: #{message_passing_layer.1} parent=1 // pred_check
      %p1007 = pneg %p65
    $region59: #{message_passing_layer.1} parent=1 // pred_check_branch
      %1009 = sbr.rel (%p1007) target = $region61
    $region60: #{message_passing_layer.1} parent=1 // pred_region
      %v1010 = vld [vmem:[%s1] sm:$0xff]
      %v1011 = vld [vmem:[#allocation4] sm:$0xff]
      %v1012 = vld [vmem:[#allocation3] sm:$0xff]
      %v1013 = vrcp.pop %v1012
      %v1014 = vmul.f32 %v1012, %v1013
      %v1015 = vsub.f32 1.0, %v1014
      %v1016 = vmul.f32 %v1013, %v1015
      %v1017 = vadd.f32 %v1013, %v1016
      %vm1018 = vweird.f32 %v1012
      %vm1019 = vweird.f32 %v1013
      %vm1020 = vmor %vm1018, %vm1019
      %v1021 = vsel %vm1020, %v1013, %v1017
      %v1022 = vand.u32 2147483647, %v1012
      %vm1023 = vcmp.eq.f32.partialorder %v1022, 8.507059e+37
      %v1024 = vand.u32 %v1012, 2147483648
      %v1025 = vor.u32 1.1754944e-38, %v1024
      %v1026 = vsel %vm1023, %v1025, %v1021
      %1028 = vset.pattern.permute.xlu0 0
      %1029 = vperm.xlu0 %1028, %v1026
      %v1030 = vpop.permute.xlu0 %1029
      %v1032 = vmul.f32 %v1011, %v1030
      %v1033 = vld [vmem:[#allocation5] sm:$0xff]
      %v1034 = vsel %vm112, %v1032, 0.0
      %1035 = vadd.xlane.f32.xlu0 %v1034
      %v1036 = vpop.xlane.xlu0 %1035
      %v1037 = vadd.f32 %v1033, %v1036
      %v1038 = vrcp.pop 64.0
      %v1039 = vmul.f32 64.0, %v1038
      %v1040 = vsub.f32 1.0, %v1039
      %v1041 = vmul.f32 %v1038, %v1040
      %v1042 = vadd.f32 %v1038, %v1041
      %vm1043 = vweird.f32 %v1038
      %v1044 = vsel %vm1043, %v1038, %v1042
      %v1045 = vmul.f32 %v1037, %v1044
      %v1046 = vld [vmem:[#allocation6] sm:$0xff]
      %v1047 = vmul.f32 %v1032, %v1032
      %v1048 = vsel %vm112, %v1047, 0.0
      %1049 = vadd.xlane.f32.xlu0 %v1048
      %v1050 = vpop.xlane.xlu0 %1049
      %v1051 = vadd.f32 %v1046, %v1050
      %v1052 = vmul.f32 %v1051, %v1044
      %v1053 = vmul.f32 %v1045, %v1045
      %v1054 = vsub.f32 %v1052, %v1053
      %v1055 = vmax.f32 %v1054, 0.0
      %v1056 = vadd.f32 %v1055, 1e-05
      %v1057 = vrsqrt.pop %v1056
      %v1058 = vmul.f32 %v1057, %v1056
      %v1059 = vmul.f32 %v1058, %v1057
      %v1060 = vmul.f32 0.5, %v1059
      %v1061 = vsub.f32 1.5, %v1060
      %v1062 = vmul.f32 %v1057, %v1061
      %vm1063 = vweird.f32 %v1056
      %vm1064 = vweird.f32 %v1057
      %vm1065 = vmor %vm1063, %vm1064
      %v1066 = vsel %vm1065, %v1057, %v1062
      %v1067 = vld [vmem:[%s9] sm:$0xff]
      %v1068 = vld [vmem:[%s9 + $0x8] sm:$0xff]
      %v1069 = vld [vmem:[%s9 + $0x10] sm:$0xff]
      %v1070 = vld [vmem:[%s9 + $0x18] sm:$0xff]
      %v1071 = vld [vmem:[%s10] sm:$0xff]
      %v1072 = vld [vmem:[%s10 + $0x8] sm:$0xff]
      %v1073 = vld [vmem:[%s10 + $0x10] sm:$0xff]
      %v1074 = vld [vmem:[%s10 + $0x18] sm:$0xff]
      %v1076 = vsel %vm112, %v1032, 0
      %1078 = vmatpush.msra.mxu0 0.0
      %1079 = vmatpush.msra.mxu0 0.0
      %1080 = vmatpush.msra.mxu0 0.0
      %1081 = vmatpush.msra.mxu0 0.0
      %1082 = vmatpush.msra.mxu0 0.0
      %1083 = vmatpush.msra.mxu0 0.0
      %1084 = vmatpush.msra.mxu0 0.0
      %1085 = vmatpush.msra.mxu0 0.0
      %1086 = vmatpush.msra.mxu0 0.0
      %1087 = vmatpush.msra.mxu0 0.0
      %1088 = vmatpush.msra.mxu0 0.0
      %1089 = vmatpush.msra.mxu0 0.0
      %1090 = vmatpush.msra.mxu0 %v1074
      %1091 = vmatpush.msra.mxu0 %v1073
      %1092 = vmatpush.msra.mxu0 %v1072
      %1093 = vmatpush.msra.mxu0 %v1071
      %1094 = vmatmul.f32.gmra.mxu0 %v1076
      %v1095 = vpop.f32.mrf.mxu0
      %v1096 = vadd.f32 0.0, %v1095
      %1097 = vdwg.mxu0
      %v1099 = vsel %vm112, %v1010, 0
      %1101 = vmatpush.msra.mxu0 0.0
      %1102 = vmatpush.msra.mxu0 0.0
      %1103 = vmatpush.msra.mxu0 0.0
      %1104 = vmatpush.msra.mxu0 0.0
      %1105 = vmatpush.msra.mxu0 0.0
      %1106 = vmatpush.msra.mxu0 0.0
      %1107 = vmatpush.msra.mxu0 0.0
      %1108 = vmatpush.msra.mxu0 0.0
      %1109 = vmatpush.msra.mxu0 0.0
      %1110 = vmatpush.msra.mxu0 0.0
      %1111 = vmatpush.msra.mxu0 0.0
      %1112 = vmatpush.msra.mxu0 0.0
      %1113 = vmatpush.msra.mxu0 %v1070
      %1114 = vmatpush.msra.mxu0 %v1069
      %1115 = vmatpush.msra.mxu0 %v1068
      %1116 = vmatpush.msra.mxu0 %v1067
      %1117 = vmatmul.f32.gmra.mxu0 %v1099
      %v1118 = vpop.f32.mrf.mxu0
      %v1119 = vadd.f32 %v1096, %v1118
      %1120 = vdwg.mxu0
      %v1121 = vld [vmem:[%s11] sm:$0x1]
      %1123 = vset.pattern.permute.xlu0 0
      %1124 = vperm.xlu0 %1123, %v1045
      %v1125 = vpop.permute.xlu0 %1124
      %v1128 = vperm.slane %v1121, 0
      %v1130 = vmul.f32 %v1125, %v1128
      %v1131 = vsub.f32 %v1119, %v1130
      %1133 = vset.pattern.permute.xlu0 0
      %1134 = vperm.xlu0 %1133, %v1066
      %v1135 = vpop.permute.xlu0 %1134
      %v1137 = vmul.f32 %v1135, %v1131
      %v1138 = vld [vmem:[%s12] sm:$0x1]
      %v1140 = vperm.slane %v1138, 0
      %v1142 = vadd.f32 %v1137, %v1140
      %v1143 = vmul.f32 %v1142, 0.01
      %v1144 = vmax.f32 %v1142, %v1143
      %1145 = vst.msk [vmem:[#allocation8] sm:$0xff] %vm112, %v1144
    $region61: #{message_passing_layer.1} parent=1 // pred_fallthru
      _
    // Predicated region
    $region62: #{message_passing_layer.1} parent=1 // pred_check
      _
    $region63: #{message_passing_layer.1} parent=1 // pred_check_branch
      %1147 = sbr.rel (0) target = $region65
    $region64: #{message_passing_layer.1} parent=1 // pred_region
      %1149 = vsyncadd [#allocation9], 0
      %s1151 = sshll.u32 [#allocation8], 4
      %s1152 = int_to_ptr.vmem [resolvable:$true] %s1151
      %s1153 = sshll.u32 %s13, 4
      %s1154 = int_to_ptr.hbm [resolvable:$true] %s1153
      %1156 = dma.vmem_to_hbm [thread:$0]  %s1152, 128, %s1154, [#allocation9]
    $region65: #{message_passing_layer.1} parent=1 // pred_fallthru
      _
    // Predicated region
    $region66: #{message_passing_layer.1} parent=1 // pred_check
      _
    $region67: #{message_passing_layer.1} parent=1 // pred_check_branch
      %1158 = sbr.rel (0) target = $region69
    $region68: #{message_passing_layer.1} parent=1 // pred_region
      _
    $region69: #{message_passing_layer.1} parent=1 // pred_fallthru
      _
    // Predicated region
    $region70: #{message_passing_layer.1} parent=1 // pred_check
      _
    $region71: #{message_passing_layer.1} parent=1 // pred_check_branch
      %1160 = sbr.rel (0) target = $region73
    $region72: #{message_passing_layer.1} parent=1 // pred_region
      _
    $region73: #{message_passing_layer.1} parent=1 // pred_fallthru
      _
    // Predicated region
    $region74: #{message_passing_layer.1} parent=1 // pred_check
      _
    $region75: #{message_passing_layer.1} parent=1 // pred_check_branch
      %1162 = sbr.rel (0) target = $region77
    $region76: #{message_passing_layer.1} parent=1 // pred_region
      %1164 = dma.done [#allocation9], 128
    $region77: #{message_passing_layer.1} parent=1 // pred_fallthru
      _
    // Predicated region
    $region78: #{message_passing_layer.1} parent=1 // pred_check
      _
    $region79: #{message_passing_layer.1} parent=1 // pred_check_branch
      %1166 = sbr.rel (0) target = $region81
    $region80: #{message_passing_layer.1} parent=1 // pred_region
      _
    $region81: #{message_passing_layer.1} parent=1 // pred_fallthru
      _
    // Predicated region
    $region82: #{message_passing_layer.1} parent=1 // pred_check
      _
    $region83: #{message_passing_layer.1} parent=1 // pred_check_branch
      %1168 = sbr.rel (0) target = $region85
    $region84: #{message_passing_layer.1} parent=1 // pred_region
      _
    $region85: #{message_passing_layer.1} parent=1 // pred_fallthru
      _
    %1169 = vsyncpa [#allocation9], 1

</llo_original>
